<compile_context>
chip_gen: v5e
topology: v5e:2x2
jax: 0.10.0
libtpu: 0.0.40
codegen_flags: <defaults>
</compile_context>

<pallas_src>
import math

import jax
import jax.numpy as jnp
from jax import lax
from jax.experimental import pallas as pl
from jax.experimental.pallas import tpu as pltpu


# ----------------------------------------------------------------------------
# Pallas kernel
# ----------------------------------------------------------------------------
def make_decoder_kernel(num_layers, hidden, seq_enc, batch, t_steps, out_pad):
    """Fused attention + multi-layer GRU + dense head kernel."""
    H, L, S, B, T, OP = hidden, num_layers, seq_enc, batch, t_steps, out_pad
    H3 = 3 * H
    scale = 1.0 / math.sqrt(H)

    def kernel(*refs):
        # inputs : x(T*B,E)bf16  enc(B,S,H)bf16  h0(L,B,H)f32  vlen(B,1)i32
        #          layer0: wx0(E,3H)bf16 wc0(H,3H)bf16 whh0(H,3H)bf16
        #                  b0(1,3H)f32 (=b_ih0 + [b_hh0_r, b_hh0_z, 0])  bhn0(1,H)f32
        #          layer l>=1: wih(H,3H)bf16 whh(H,3H)bf16 bx(1,3H)f32 bhn(1,H)f32
        #          dense: wd(H,OP)bf16 bd(1,OP)f32   (padded lane-dense to OP=128k)
        # outputs: out(T*B,OP)f32  hout(L,B,H)f32
        (x_ref, enc_ref, h0_ref, vlen_ref,
         wx0_ref, wc0_ref, whh0_ref, b0_ref, bhn0_ref) = refs[:9]
        p = 9
        upper = []                                   # (wih, whh, bx, bhn) per layer>=1
        for _ in range(L - 1):
            upper.append(refs[p:p + 4])
            p += 4
        wd_ref, bd_ref = refs[p], refs[p + 1]
        out_ref, hout_ref = refs[p + 2], refs[p + 3]

        f32, bf16 = jnp.float32, jnp.bfloat16

        # ---- attention (computed once; bf16 MXU dots, f32 accumulation) ----
        enc = enc_ref[...]                                            # (B,S,H) bf16
        q = h0_ref[L - 1].astype(bf16)[:, None, :]                    # (B,1,H)
        scores = jnp.einsum('bqh,bsh->bqs', q, enc,
                            preferred_element_type=f32)[:, 0, :] * scale   # (B,S) f32
        pos = lax.broadcasted_iota(jnp.int32, (B, S), 1)
        scores = jnp.where(pos < vlen_ref[...], scores, -1e9)
        scores = scores - jnp.max(scores, axis=-1, keepdims=True)
        w = jnp.exp(scores)
        inv = pl.reciprocal(jnp.sum(w, axis=-1, keepdims=True), approx=True)
        attn = (w * inv)[:, None, :].astype(bf16)                     # (B,1,S)
        context = jnp.einsum('bqs,bsh->bqh', attn, enc,
                             preferred_element_type=f32)[:, 0, :]     # (B,H) f32

        # ---- loop-invariant layer-0 input-side pre-activations ----
        # context half (+ folded b_ih0 and b_hh0[r,z]) — single (B,H)@(H,3H) dot
        ctx_all = (jnp.dot(context.astype(bf16), wc0_ref[...],
                           preferred_element_type=f32) + b0_ref[...])        # (B,3H)
        # x half for all T steps: one fused (T*B,E)@(E,3H) matmul, kept as a value
        gx0 = jnp.dot(x_ref[...], wx0_ref[...], preferred_element_type=f32)  # (T*B,3H)

        # hoisted bias broadcasts (only b_hh[n] must stay in r*(gh_n + b_hn))
        bhn = [jnp.broadcast_to(bhn0_ref[...], (B, H))]
        biasx = [None]
        whh_refs = [whh0_ref]
        wih_refs = [None]
        for l in range(1, L):
            wih_r, whh_r, bx_r, bn_r = upper[l - 1]
            wih_refs.append(wih_r)
            whh_refs.append(whh_r)
            biasx.append(jnp.broadcast_to(bx_r[...], (B, H3)))
            bhn.append(jnp.broadcast_to(bn_r[...], (B, H)))

        def gru_gates(pre, gh, h_prev, bhn_l):
            # pre: fused input-side pre-activation (biases r/z/n-input folded in)
            # gh : fused recurrent projection, no bias
            r = jax.nn.sigmoid(pre[:, :H] + gh[:, :H])
            z = jax.nn.sigmoid(pre[:, H:2 * H] + gh[:, H:2 * H])
            n = jnp.tanh(pre[:, 2 * H:] + r * (gh[:, 2 * H:] + bhn_l))
            return (1.0 - z) * n + z * h_prev

        h = [h0_ref[l] for l in range(L)]          # f32 (B,H) per layer
        htops = []                                 # per-step top-layer hiddens (values)
        for t in range(T):                         # fully unrolled at trace time
            # issue EVERY layer's recurrent dot up front (depends only on prev h)
            gh = [jnp.dot(h[l].astype(bf16), whh_refs[l][...],
                          preferred_element_type=f32) for l in range(L)]
            pre = gx0[t * B:(t + 1) * B, :] + ctx_all          # layer-0 fused pre-act
            new_h = []
            inp = None
            for l in range(L):                     # inter-layer dropout: no-op at inference
                if l > 0:
                    pre = (jnp.dot(inp.astype(bf16), wih_refs[l][...],
                                   preferred_element_type=f32) + biasx[l])
                h_l = gru_gates(pre, gh[l], h[l], bhn[l])
                new_h.append(h_l)
                inp = h_l
            h = new_h
            htops.append(inp)

        for l in range(L):
            hout_ref[l] = h[l]

        # ---- dense head: one (T*B,H)@(H,OP) matmul + one lane-dense store ----
        htop = jnp.concatenate(htops, axis=0)                          # (T*B, H)
        y = jnp.dot(htop.astype(bf16), wd_ref[...],
                    preferred_element_type=f32) + bd_ref[...]          # (T*B, OP)
        out_ref[...] = y

    return kernel


# ----------------------------------------------------------------------------
# Wrapper (layout transposes, fused-gate parameter packing, pallas_call)
# ----------------------------------------------------------------------------
def decoder_forward(X, state, params):
    enc_outputs, hidden_state, enc_valid_len = state
    B, T, E = X.shape
    _, S, H = enc_outputs.shape
    L = hidden_state.shape[0]
    O = params["w_dense"].shape[0]
    OP = max(128, ((O + 127) // 128) * 128)        # lane-dense padded output width
    H3 = 3 * H
    f32, bf16 = jnp.float32, jnp.bfloat16

    # time-major (T*B, E) slab so the kernel works on 2-D lane/sublane-friendly data
    x2d = jnp.transpose(X, (1, 0, 2)).reshape(T * B, E).astype(bf16)
    vlen = enc_valid_len.reshape(B, 1).astype(jnp.int32)

    def fused_bias(b_ih, b_hh):
        # fold b_ih (all gates) + b_hh[r], b_hh[z] into one (1,3H) bias;
        # b_hh[n] stays separate (it is multiplied by the reset gate).
        bx = b_ih.astype(f32) + jnp.concatenate(
            [b_hh[:2 * H].astype(f32), jnp.zeros((H,), f32)])
        return bx.reshape(1, H3), b_hh[2 * H:].astype(f32).reshape(1, H)

    inputs = [x2d, enc_outputs.astype(bf16), hidden_state.astype(f32), vlen]

    # layer 0: fused-gate (in,3H) weights, split into context / x input halves
    w_ih0_t = jnp.transpose(params["w_ih_l0"]).astype(bf16)            # (H+E, 3H)
    b0, bhn0 = fused_bias(params["b_ih_l0"], params["b_hh_l0"])
    inputs += [w_ih0_t[H:, :],                                         # wx0 (E, 3H)
               w_ih0_t[:H, :],                                         # wc0 (H, 3H)
               jnp.transpose(params["w_hh_l0"]).astype(bf16),          # whh0 (H, 3H)
               b0, bhn0]

    for l in range(1, L):
        bx, bn = fused_bias(params[f"b_ih_l{l}"], params[f"b_hh_l{l}"])
        inputs += [jnp.transpose(params[f"w_ih_l{l}"]).astype(bf16),   # (H, 3H)
                   jnp.transpose(params[f"w_hh_l{l}"]).astype(bf16),   # (H, 3H)
                   bx, bn]

    # dense head padded to OP lanes (lane-dense, unmasked store in the kernel)
    wd = jnp.zeros((H, OP), bf16).at[:, :O].set(
        jnp.transpose(params["w_dense"]).astype(bf16))
    bd = jnp.zeros((1, OP), f32).at[:, :O].set(
        params["b_dense"].astype(f32).reshape(1, O))
    inputs += [wd, bd]

    kernel = make_decoder_kernel(L, H, S, B, T, OP)

    y2d, h_out = pl.pallas_call(
        kernel,
        out_shape=(jax.ShapeDtypeStruct((T * B, OP), f32),
                   jax.ShapeDtypeStruct((L, B, H), f32)),
        in_specs=[pl.BlockSpec(memory_space=pltpu.MemorySpace.VMEM)] * len(inputs),
        out_specs=(pl.BlockSpec(memory_space=pltpu.MemorySpace.VMEM),
                   pl.BlockSpec(memory_space=pltpu.MemorySpace.VMEM)),
        compiler_params=pltpu.CompilerParams(vmem_limit_bytes=32 * 1024 * 1024),
    )(*inputs)

    outputs = jnp.transpose(y2d[:, :O].reshape(T, B, O), (1, 0, 2))    # (B, T, O)
    return outputs, (enc_outputs, h_out, enc_valid_len)


# ----------------------------------------------------------------------------
# Pure-JAX f32 reference (for correctness check only)
# ----------------------------------------------------------------------------
def reference_forward(X, state, params):
    enc, h0, vlen = state
    B, T, E = X.shape
    L, _, H = h0.shape
    q = h0[-1]
    scores = jnp.sum(q[:, None, :] * enc, -1) / math.sqrt(H)
    pos = jnp.arange(enc.shape[1])[None, :]
    mask = pos < vlen[:, None]
    scores = jnp.where(mask, scores, -1e9)
    attn = jax.nn.softmax(scores, axis=-1)
    context = jnp.sum(attn[:, :, None] * enc, axis=1)
    h = [h0[l] for l in range(L)]
    outs = []
    for t in range(T):
        inp = jnp.concatenate([context, X[:, t, :]], axis=-1)
        for l in range(L):
            gx = inp @ params[f"w_ih_l{l}"].T + params[f"b_ih_l{l}"]
            gh = h[l] @ params[f"w_hh_l{l}"].T + params[f"b_hh_l{l}"]
            r = jax.nn.sigmoid(gx[:, :H] + gh[:, :H])
            z = jax.nn.sigmoid(gx[:, H:2 * H] + gh[:, H:2 * H])
            n = jnp.tanh(gx[:, 2 * H:] + r * gh[:, 2 * H:])
            h[l] = (1.0 - z) * n + z * h[l]
            inp = h[l]
        outs.append(inp @ params["w_dense"].T + params["b_dense"])
    return jnp.stack(outs, axis=1), jnp.stack(h, axis=0)


# ----------------------------------------------------------------------------
# Deterministic parameter init (mirrors nn.GRU / nn.Linear shapes)
# ----------------------------------------------------------------------------
def init_params(key, input_size, output_size, hidden, num_layers):
    k_gru = 1.0 / math.sqrt(hidden)
    k_lin = 1.0 / math.sqrt(hidden)
    params = {}
    keys = jax.random.split(key, 4 * num_layers + 2)
    ki = 0
    for l in range(num_layers):
        in_dim = input_size if l == 0 else hidden
        params[f"w_ih_l{l}"] = jax.random.uniform(
            keys[ki], (3 * hidden, in_dim), jnp.float32, -k_gru, k_gru); ki += 1
        params[f"w_hh_l{l}"] = jax.random.uniform(
            keys[ki], (3 * hidden, hidden), jnp.float32, -k_gru, k_gru); ki += 1
        params[f"b_ih_l{l}"] = jax.random.uniform(
            keys[ki], (3 * hidden,), jnp.float32, -k_gru, k_gru); ki += 1
        params[f"b_hh_l{l}"] = jax.random.uniform(
            keys[ki], (3 * hidden,), jnp.float32, -k_gru, k_gru); ki += 1
    params["w_dense"] = jax.random.uniform(
        keys[ki], (output_size, hidden), jnp.float32, -k_lin, k_lin); ki += 1
    params["b_dense"] = jax.random.uniform(
        keys[ki], (output_size,), jnp.float32, -k_lin, k_lin)
    return params


if __name__ == "__main__":
    B, T, S = 2, 8, 8           # batch, decode steps, encoder seq len
    E, H, L, O = 16, 32, 2, 24  # embed, hidden, num_layers, output dim
    INPUT_SIZE = H + E          # GRU input = [context ; x_t]  (arg[0] of the module)

    key = jax.random.PRNGKey(0)
    k_x, k_enc, k_h, k_p = jax.random.split(key, 4)

    X = jax.random.normal(k_x, (B, T, E), jnp.float32)
    enc_outputs = jax.random.normal(k_enc, (B, S, H), jnp.float32)
    hidden_state = jax.random.normal(k_h, (L, B, H), jnp.float32)
    enc_valid_len = jnp.array([5, 8], dtype=jnp.int32)

    params = init_params(k_p, INPUT_SIZE, O, H, L)

    # init_state(enc_outputs, hidden_state, enc_valid_len)
    state = (enc_outputs, hidden_state, enc_valid_len)

    outputs, new_state = decoder_forward(X, state, params)
    outputs = jax.block_until_ready(outputs)
    h_out = jax.block_until_ready(new_state[1])

    ref_out, ref_h = reference_forward(X, state, params)
    err_o = float(jnp.max(jnp.abs(outputs - ref_out)))
    err_h = float(jnp.max(jnp.abs(h_out - ref_h)))
    assert outputs.shape == (B, T, O) and h_out.shape == (L, B, H)
    # tolerance covers bf16 MXU operands (≈2^-8 per-operand rounding, f32 accumulation)
    # compounded through T=8 recurrent steps; structural bugs would be >> 0.1.
    assert err_o < 3e-2 and err_h < 3e-2, (err_o, err_h)

    print("KERNEL_OK")
</pallas_src>

<mosaic_0001>
module attributes {stable_mosaic.version = 11 : i64} {
  func.func @kernel(%arg0: memref<16x16xbf16, #tpu.memory_space<vmem>>, %arg1: memref<2x8x32xbf16, #tpu.memory_space<vmem>>, %arg2: memref<2x2x32xf32, #tpu.memory_space<vmem>>, %arg3: memref<2x1xi32, #tpu.memory_space<vmem>>, %arg4: memref<16x96xbf16, #tpu.memory_space<vmem>>, %arg5: memref<32x96xbf16, #tpu.memory_space<vmem>>, %arg6: memref<32x96xbf16, #tpu.memory_space<vmem>>, %arg7: memref<1x96xf32, #tpu.memory_space<vmem>>, %arg8: memref<1x32xf32, #tpu.memory_space<vmem>>, %arg9: memref<32x96xbf16, #tpu.memory_space<vmem>>, %arg10: memref<32x96xbf16, #tpu.memory_space<vmem>>, %arg11: memref<1x96xf32, #tpu.memory_space<vmem>>, %arg12: memref<1x32xf32, #tpu.memory_space<vmem>>, %arg13: memref<32x128xbf16, #tpu.memory_space<vmem>>, %arg14: memref<1x128xf32, #tpu.memory_space<vmem>>, %arg15: memref<16x128xf32, #tpu.memory_space<vmem>>, %arg16: memref<2x2x32xf32, #tpu.memory_space<vmem>>) attributes {dimension_semantics = [], scalar_prefetch = 0 : i64, scratch_operands = 0 : i64, tpu.core_type = #tpu.core_type<tc>} {
    %c0 = arith.constant 0 : index
    %c0_0 = arith.constant 0 : index
    %c0_1 = arith.constant 0 : index
    %0 = vector.load %arg1[%c0, %c0_0, %c0_1] : memref<2x8x32xbf16, #tpu.memory_space<vmem>>, vector<2x8x32xbf16>
    %c1 = arith.constant 1 : index
    %c0_2 = arith.constant 0 : index
    %c0_3 = arith.constant 0 : index
    %1 = vector.load %arg2[%c1, %c0_2, %c0_3] : memref<2x2x32xf32, #tpu.memory_space<vmem>>, vector<1x2x32xf32>
    %2 = vector.shape_cast %1 : vector<1x2x32xf32> to vector<2x32xf32>
    %3 = arith.truncf %2 : vector<2x32xf32> to vector<2x32xbf16>
    %4 = vector.shape_cast %3 : vector<2x32xbf16> to vector<2x1x32xbf16>
    "tpu.trace_start"() <{level = 10 : i32, message = "bqh,bsh->bqs"}> : () -> ()
    %cst = arith.constant dense<0.000000e+00> : vector<2x1x8xf32>
    %5 = tpu.matmul %4, %0, %cst {dimension_numbers = #tpu.dot_dimension_numbers<[2], [2], [1], [1], [0, 0, 0, 1, 1, 1], [0], [0]>} : vector<2x1x32xbf16>, vector<2x8x32xbf16>, vector<2x1x8xf32> -> vector<2x1x8xf32>
    "tpu.trace_stop"() : () -> ()
    %6 = vector.shape_cast %5 : vector<2x1x8xf32> to vector<2x8xf32>
    %cst_4 = arith.constant 0.176776692 : f32
    %7 = vector.broadcast %cst_4 : f32 to vector<2x8xf32>
    %8 = arith.mulf %6, %7 : vector<2x8xf32>
    %9 = tpu.iota {dimensions = array<i32: 1>} : vector<2x8xi32>
    %c0_5 = arith.constant 0 : index
    %c0_6 = arith.constant 0 : index
    %10 = vector.load %arg3[%c0_5, %c0_6] : memref<2x1xi32, #tpu.memory_space<vmem>>, vector<2x1xi32>
    %11 = vector.broadcast %10 : vector<2x1xi32> to vector<2x8xi32>
    %12 = arith.cmpi slt, %9, %11 : vector<2x8xi32>
    %cst_7 = arith.constant -1.000000e+09 : f32
    %13 = vector.broadcast %cst_7 : f32 to vector<2x8xf32>
    %14 = arith.select %12, %8, %13 : vector<2x8xi1>, vector<2x8xf32>
    %cst_8 = arith.constant dense<0xFF800000> : vector<2xf32>
    %15 = vector.multi_reduction <maximumf>, %14, %cst_8 [1] : vector<2x8xf32> to vector<2xf32>
    %16 = vector.shape_cast %15 : vector<2xf32> to vector<2x1xf32>
    %17 = vector.broadcast %16 : vector<2x1xf32> to vector<2x8xf32>
    %18 = arith.subf %14, %17 : vector<2x8xf32>
    %19 = math.exp %18 : vector<2x8xf32>
    %cst_9 = arith.constant dense<0.000000e+00> : vector<2xf32>
    %20 = vector.multi_reduction <add>, %19, %cst_9 [1] : vector<2x8xf32> to vector<2xf32>
    %21 = vector.shape_cast %20 : vector<2xf32> to vector<2x1xf32>
    %22 = tpu.reciprocal %21 {approx = true} : vector<2x1xf32> -> vector<2x1xf32>
    %23 = vector.broadcast %22 : vector<2x1xf32> to vector<2x8xf32>
    %24 = arith.mulf %19, %23 : vector<2x8xf32>
    %25 = vector.shape_cast %24 : vector<2x8xf32> to vector<2x1x8xf32>
    %26 = arith.truncf %25 : vector<2x1x8xf32> to vector<2x1x8xbf16>
    "tpu.trace_start"() <{level = 10 : i32, message = "bqs,bsh->bqh"}> : () -> ()
    %cst_10 = arith.constant dense<0.000000e+00> : vector<2x1x32xf32>
    %27 = tpu.matmul %26, %0, %cst_10 {dimension_numbers = #tpu.dot_dimension_numbers<[2], [1], [1], [2], [0, 0, 0, 1, 1, 2], [0], [0]>} : vector<2x1x8xbf16>, vector<2x8x32xbf16>, vector<2x1x32xf32> -> vector<2x1x32xf32>
    "tpu.trace_stop"() : () -> ()
    %28 = vector.shape_cast %27 : vector<2x1x32xf32> to vector<2x32xf32>
    %29 = arith.truncf %28 : vector<2x32xf32> to vector<2x32xbf16>
    %c0_11 = arith.constant 0 : index
    %c0_12 = arith.constant 0 : index
    %30 = vector.load %arg5[%c0_11, %c0_12] : memref<32x96xbf16, #tpu.memory_space<vmem>>, vector<32x96xbf16>
    %cst_13 = arith.constant dense<0.000000e+00> : vector<2x96xf32>
    %31 = tpu.matmul %29, %30, %cst_13 {dimension_numbers = #tpu.dot_dimension_numbers<[1], [0], [0], [1], [0, 0, 1, 1], [], []>} : vector<2x32xbf16>, vector<32x96xbf16>, vector<2x96xf32> -> vector<2x96xf32>
    %c0_14 = arith.constant 0 : index
    %c0_15 = arith.constant 0 : index
    %32 = vector.load %arg7[%c0_14, %c0_15] : memref<1x96xf32, #tpu.memory_space<vmem>>, vector<1x96xf32>
    %33 = vector.broadcast %32 : vector<1x96xf32> to vector<2x96xf32>
    %34 = arith.addf %31, %33 : vector<2x96xf32>
    %c0_16 = arith.constant 0 : index
    %c0_17 = arith.constant 0 : index
    %35 = vector.load %arg0[%c0_16, %c0_17] : memref<16x16xbf16, #tpu.memory_space<vmem>>, vector<16x16xbf16>
    %c0_18 = arith.constant 0 : index
    %c0_19 = arith.constant 0 : index
    %36 = vector.load %arg4[%c0_18, %c0_19] : memref<16x96xbf16, #tpu.memory_space<vmem>>, vector<16x96xbf16>
    %cst_20 = arith.constant dense<0.000000e+00> : vector<16x96xf32>
    %37 = tpu.matmul %35, %36, %cst_20 {dimension_numbers = #tpu.dot_dimension_numbers<[1], [0], [0], [1], [0, 0, 1, 1], [], []>} : vector<16x16xbf16>, vector<16x96xbf16>, vector<16x96xf32> -> vector<16x96xf32>
    %c0_21 = arith.constant 0 : index
    %c0_22 = arith.constant 0 : index
    %38 = vector.load %arg8[%c0_21, %c0_22] : memref<1x32xf32, #tpu.memory_space<vmem>>, vector<1x32xf32>
    %39 = vector.shape_cast %38 : vector<1x32xf32> to vector<1x32xf32>
    %40 = vector.broadcast %39 : vector<1x32xf32> to vector<2x32xf32>
    %c0_23 = arith.constant 0 : index
    %c0_24 = arith.constant 0 : index
    %41 = vector.load %arg11[%c0_23, %c0_24] : memref<1x96xf32, #tpu.memory_space<vmem>>, vector<1x96xf32>
    %42 = vector.shape_cast %41 : vector<1x96xf32> to vector<1x96xf32>
    %43 = vector.broadcast %42 : vector<1x96xf32> to vector<2x96xf32>
    %c0_25 = arith.constant 0 : index
    %c0_26 = arith.constant 0 : index
    %44 = vector.load %arg12[%c0_25, %c0_26] : memref<1x32xf32, #tpu.memory_space<vmem>>, vector<1x32xf32>
    %45 = vector.shape_cast %44 : vector<1x32xf32> to vector<1x32xf32>
    %46 = vector.broadcast %45 : vector<1x32xf32> to vector<2x32xf32>
    %c0_27 = arith.constant 0 : index
    %c0_28 = arith.constant 0 : index
    %c0_29 = arith.constant 0 : index
    %47 = vector.load %arg2[%c0_27, %c0_28, %c0_29] : memref<2x2x32xf32, #tpu.memory_space<vmem>>, vector<1x2x32xf32>
    %48 = vector.shape_cast %47 : vector<1x2x32xf32> to vector<2x32xf32>
    %c1_30 = arith.constant 1 : index
    %c0_31 = arith.constant 0 : index
    %c0_32 = arith.constant 0 : index
    %49 = vector.load %arg2[%c1_30, %c0_31, %c0_32] : memref<2x2x32xf32, #tpu.memory_space<vmem>>, vector<1x2x32xf32>
    %50 = vector.shape_cast %49 : vector<1x2x32xf32> to vector<2x32xf32>
    %51 = arith.truncf %48 : vector<2x32xf32> to vector<2x32xbf16>
    %c0_33 = arith.constant 0 : index
    %c0_34 = arith.constant 0 : index
    %52 = vector.load %arg6[%c0_33, %c0_34] : memref<32x96xbf16, #tpu.memory_space<vmem>>, vector<32x96xbf16>
    %cst_35 = arith.constant dense<0.000000e+00> : vector<2x96xf32>
    %53 = tpu.matmul %51, %52, %cst_35 {dimension_numbers = #tpu.dot_dimension_numbers<[1], [0], [0], [1], [0, 0, 1, 1], [], []>} : vector<2x32xbf16>, vector<32x96xbf16>, vector<2x96xf32> -> vector<2x96xf32>
    %54 = arith.truncf %50 : vector<2x32xf32> to vector<2x32xbf16>
    %c0_36 = arith.constant 0 : index
    %c0_37 = arith.constant 0 : index
    %55 = vector.load %arg10[%c0_36, %c0_37] : memref<32x96xbf16, #tpu.memory_space<vmem>>, vector<32x96xbf16>
    %cst_38 = arith.constant dense<0.000000e+00> : vector<2x96xf32>
    %56 = tpu.matmul %54, %55, %cst_38 {dimension_numbers = #tpu.dot_dimension_numbers<[1], [0], [0], [1], [0, 0, 1, 1], [], []>} : vector<2x32xbf16>, vector<32x96xbf16>, vector<2x96xf32> -> vector<2x96xf32>
    %57 = vector.extract_strided_slice %37 {offsets = [0, 0], sizes = [2, 96], strides = [1, 1]} : vector<16x96xf32> to vector<2x96xf32>
    %58 = arith.addf %57, %34 : vector<2x96xf32>
    %59 = vector.extract_strided_slice %58 {offsets = [0, 0], sizes = [2, 32], strides = [1, 1]} : vector<2x96xf32> to vector<2x32xf32>
    %60 = vector.extract_strided_slice %53 {offsets = [0, 0], sizes = [2, 32], strides = [1, 1]} : vector<2x96xf32> to vector<2x32xf32>
    %61 = arith.addf %59, %60 : vector<2x32xf32>
    %62 = arith.negf %61 : vector<2x32xf32>
    %63 = math.exp %62 : vector<2x32xf32>
    %cst_39 = arith.constant 1.000000e+00 : f32
    %64 = vector.broadcast %cst_39 : f32 to vector<2x32xf32>
    %65 = arith.addf %64, %63 : vector<2x32xf32>
    %66 = arith.divf %64, %65 : vector<2x32xf32>
    %67 = vector.extract_strided_slice %58 {offsets = [0, 32], sizes = [2, 32], strides = [1, 1]} : vector<2x96xf32> to vector<2x32xf32>
    %68 = vector.extract_strided_slice %53 {offsets = [0, 32], sizes = [2, 32], strides = [1, 1]} : vector<2x96xf32> to vector<2x32xf32>
    %69 = arith.addf %67, %68 : vector<2x32xf32>
    %70 = arith.negf %69 : vector<2x32xf32>
    %71 = math.exp %70 : vector<2x32xf32>
    %cst_40 = arith.constant 1.000000e+00 : f32
    %72 = vector.broadcast %cst_40 : f32 to vector<2x32xf32>
    %73 = arith.addf %72, %71 : vector<2x32xf32>
    %74 = arith.divf %72, %73 : vector<2x32xf32>
    %75 = vector.extract_strided_slice %58 {offsets = [0, 64], sizes = [2, 32], strides = [1, 1]} : vector<2x96xf32> to vector<2x32xf32>
    %76 = vector.extract_strided_slice %53 {offsets = [0, 64], sizes = [2, 32], strides = [1, 1]} : vector<2x96xf32> to vector<2x32xf32>
    %77 = arith.addf %76, %40 : vector<2x32xf32>
    %78 = arith.mulf %66, %77 : vector<2x32xf32>
    %79 = arith.addf %75, %78 : vector<2x32xf32>
    %80 = math.tanh %79 : vector<2x32xf32>
    %cst_41 = arith.constant 1.000000e+00 : f32
    %81 = vector.broadcast %cst_41 : f32 to vector<2x32xf32>
    %82 = arith.subf %81, %74 : vector<2x32xf32>
    %83 = arith.mulf %82, %80 : vector<2x32xf32>
    %84 = arith.mulf %74, %48 : vector<2x32xf32>
    %85 = arith.addf %83, %84 : vector<2x32xf32>
    %86 = arith.truncf %85 : vector<2x32xf32> to vector<2x32xbf16>
    %c0_42 = arith.constant 0 : index
    %c0_43 = arith.constant 0 : index
    %87 = vector.load %arg9[%c0_42, %c0_43] : memref<32x96xbf16, #tpu.memory_space<vmem>>, vector<32x96xbf16>
    %cst_44 = arith.constant dense<0.000000e+00> : vector<2x96xf32>
    %88 = tpu.matmul %86, %87, %cst_44 {dimension_numbers = #tpu.dot_dimension_numbers<[1], [0], [0], [1], [0, 0, 1, 1], [], []>} : vector<2x32xbf16>, vector<32x96xbf16>, vector<2x96xf32> -> vector<2x96xf32>
    %89 = arith.addf %88, %43 : vector<2x96xf32>
    %90 = vector.extract_strided_slice %89 {offsets = [0, 0], sizes = [2, 32], strides = [1, 1]} : vector<2x96xf32> to vector<2x32xf32>
    %91 = vector.extract_strided_slice %56 {offsets = [0, 0], sizes = [2, 32], strides = [1, 1]} : vector<2x96xf32> to vector<2x32xf32>
    %92 = arith.addf %90, %91 : vector<2x32xf32>
    %93 = arith.negf %92 : vector<2x32xf32>
    %94 = math.exp %93 : vector<2x32xf32>
    %cst_45 = arith.constant 1.000000e+00 : f32
    %95 = vector.broadcast %cst_45 : f32 to vector<2x32xf32>
    %96 = arith.addf %95, %94 : vector<2x32xf32>
    %97 = arith.divf %95, %96 : vector<2x32xf32>
    %98 = vector.extract_strided_slice %89 {offsets = [0, 32], sizes = [2, 32], strides = [1, 1]} : vector<2x96xf32> to vector<2x32xf32>
    %99 = vector.extract_strided_slice %56 {offsets = [0, 32], sizes = [2, 32], strides = [1, 1]} : vector<2x96xf32> to vector<2x32xf32>
    %100 = arith.addf %98, %99 : vector<2x32xf32>
    %101 = arith.negf %100 : vector<2x32xf32>
    %102 = math.exp %101 : vector<2x32xf32>
    %cst_46 = arith.constant 1.000000e+00 : f32
    %103 = vector.broadcast %cst_46 : f32 to vector<2x32xf32>
    %104 = arith.addf %103, %102 : vector<2x32xf32>
    %105 = arith.divf %103, %104 : vector<2x32xf32>
    %106 = vector.extract_strided_slice %89 {offsets = [0, 64], sizes = [2, 32], strides = [1, 1]} : vector<2x96xf32> to vector<2x32xf32>
    %107 = vector.extract_strided_slice %56 {offsets = [0, 64], sizes = [2, 32], strides = [1, 1]} : vector<2x96xf32> to vector<2x32xf32>
    %108 = arith.addf %107, %46 : vector<2x32xf32>
    %109 = arith.mulf %97, %108 : vector<2x32xf32>
    %110 = arith.addf %106, %109 : vector<2x32xf32>
    %111 = math.tanh %110 : vector<2x32xf32>
    %cst_47 = arith.constant 1.000000e+00 : f32
    %112 = vector.broadcast %cst_47 : f32 to vector<2x32xf32>
    %113 = arith.subf %112, %105 : vector<2x32xf32>
    %114 = arith.mulf %113, %111 : vector<2x32xf32>
    %115 = arith.mulf %105, %50 : vector<2x32xf32>
    %116 = arith.addf %114, %115 : vector<2x32xf32>
    %117 = arith.truncf %85 : vector<2x32xf32> to vector<2x32xbf16>
    %c0_48 = arith.constant 0 : index
    %c0_49 = arith.constant 0 : index
    %118 = vector.load %arg6[%c0_48, %c0_49] : memref<32x96xbf16, #tpu.memory_space<vmem>>, vector<32x96xbf16>
    %cst_50 = arith.constant dense<0.000000e+00> : vector<2x96xf32>
    %119 = tpu.matmul %117, %118, %cst_50 {dimension_numbers = #tpu.dot_dimension_numbers<[1], [0], [0], [1], [0, 0, 1, 1], [], []>} : vector<2x32xbf16>, vector<32x96xbf16>, vector<2x96xf32> -> vector<2x96xf32>
    %120 = arith.truncf %116 : vector<2x32xf32> to vector<2x32xbf16>
    %c0_51 = arith.constant 0 : index
    %c0_52 = arith.constant 0 : index
    %121 = vector.load %arg10[%c0_51, %c0_52] : memref<32x96xbf16, #tpu.memory_space<vmem>>, vector<32x96xbf16>
    %cst_53 = arith.constant dense<0.000000e+00> : vector<2x96xf32>
    %122 = tpu.matmul %120, %121, %cst_53 {dimension_numbers = #tpu.dot_dimension_numbers<[1], [0], [0], [1], [0, 0, 1, 1], [], []>} : vector<2x32xbf16>, vector<32x96xbf16>, vector<2x96xf32> -> vector<2x96xf32>
    %123 = vector.extract_strided_slice %37 {offsets = [2, 0], sizes = [2, 96], strides = [1, 1]} : vector<16x96xf32> to vector<2x96xf32>
    %124 = arith.addf %123, %34 : vector<2x96xf32>
    %125 = vector.extract_strided_slice %124 {offsets = [0, 0], sizes = [2, 32], strides = [1, 1]} : vector<2x96xf32> to vector<2x32xf32>
    %126 = vector.extract_strided_slice %119 {offsets = [0, 0], sizes = [2, 32], strides = [1, 1]} : vector<2x96xf32> to vector<2x32xf32>
    %127 = arith.addf %125, %126 : vector<2x32xf32>
    %128 = arith.negf %127 : vector<2x32xf32>
    %129 = math.exp %128 : vector<2x32xf32>
    %cst_54 = arith.constant 1.000000e+00 : f32
    %130 = vector.broadcast %cst_54 : f32 to vector<2x32xf32>
    %131 = arith.addf %130, %129 : vector<2x32xf32>
    %132 = arith.divf %130, %131 : vector<2x32xf32>
    %133 = vector.extract_strided_slice %124 {offsets = [0, 32], sizes = [2, 32], strides = [1, 1]} : vector<2x96xf32> to vector<2x32xf32>
    %134 = vector.extract_strided_slice %119 {offsets = [0, 32], sizes = [2, 32], strides = [1, 1]} : vector<2x96xf32> to vector<2x32xf32>
    %135 = arith.addf %133, %134 : vector<2x32xf32>
    %136 = arith.negf %135 : vector<2x32xf32>
    %137 = math.exp %136 : vector<2x32xf32>
    %cst_55 = arith.constant 1.000000e+00 : f32
    %138 = vector.broadcast %cst_55 : f32 to vector<2x32xf32>
    %139 = arith.addf %138, %137 : vector<2x32xf32>
    %140 = arith.divf %138, %139 : vector<2x32xf32>
    %141 = vector.extract_strided_slice %124 {offsets = [0, 64], sizes = [2, 32], strides = [1, 1]} : vector<2x96xf32> to vector<2x32xf32>
    %142 = vector.extract_strided_slice %119 {offsets = [0, 64], sizes = [2, 32], strides = [1, 1]} : vector<2x96xf32> to vector<2x32xf32>
    %143 = arith.addf %142, %40 : vector<2x32xf32>
    %144 = arith.mulf %132, %143 : vector<2x32xf32>
    %145 = arith.addf %141, %144 : vector<2x32xf32>
    %146 = math.tanh %145 : vector<2x32xf32>
    %cst_56 = arith.constant 1.000000e+00 : f32
    %147 = vector.broadcast %cst_56 : f32 to vector<2x32xf32>
    %148 = arith.subf %147, %140 : vector<2x32xf32>
    %149 = arith.mulf %148, %146 : vector<2x32xf32>
    %150 = arith.mulf %140, %85 : vector<2x32xf32>
    %151 = arith.addf %149, %150 : vector<2x32xf32>
    %152 = arith.truncf %151 : vector<2x32xf32> to vector<2x32xbf16>
    %c0_57 = arith.constant 0 : index
    %c0_58 = arith.constant 0 : index
    %153 = vector.load %arg9[%c0_57, %c0_58] : memref<32x96xbf16, #tpu.memory_space<vmem>>, vector<32x96xbf16>
    %cst_59 = arith.constant dense<0.000000e+00> : vector<2x96xf32>
    %154 = tpu.matmul %152, %153, %cst_59 {dimension_numbers = #tpu.dot_dimension_numbers<[1], [0], [0], [1], [0, 0, 1, 1], [], []>} : vector<2x32xbf16>, vector<32x96xbf16>, vector<2x96xf32> -> vector<2x96xf32>
    %155 = arith.addf %154, %43 : vector<2x96xf32>
    %156 = vector.extract_strided_slice %155 {offsets = [0, 0], sizes = [2, 32], strides = [1, 1]} : vector<2x96xf32> to vector<2x32xf32>
    %157 = vector.extract_strided_slice %122 {offsets = [0, 0], sizes = [2, 32], strides = [1, 1]} : vector<2x96xf32> to vector<2x32xf32>
    %158 = arith.addf %156, %157 : vector<2x32xf32>
    %159 = arith.negf %158 : vector<2x32xf32>
    %160 = math.exp %159 : vector<2x32xf32>
    %cst_60 = arith.constant 1.000000e+00 : f32
    %161 = vector.broadcast %cst_60 : f32 to vector<2x32xf32>
    %162 = arith.addf %161, %160 : vector<2x32xf32>
    %163 = arith.divf %161, %162 : vector<2x32xf32>
    %164 = vector.extract_strided_slice %155 {offsets = [0, 32], sizes = [2, 32], strides = [1, 1]} : vector<2x96xf32> to vector<2x32xf32>
    %165 = vector.extract_strided_slice %122 {offsets = [0, 32], sizes = [2, 32], strides = [1, 1]} : vector<2x96xf32> to vector<2x32xf32>
    %166 = arith.addf %164, %165 : vector<2x32xf32>
    %167 = arith.negf %166 : vector<2x32xf32>
    %168 = math.exp %167 : vector<2x32xf32>
    %cst_61 = arith.constant 1.000000e+00 : f32
    %169 = vector.broadcast %cst_61 : f32 to vector<2x32xf32>
    %170 = arith.addf %169, %168 : vector<2x32xf32>
    %171 = arith.divf %169, %170 : vector<2x32xf32>
    %172 = vector.extract_strided_slice %155 {offsets = [0, 64], sizes = [2, 32], strides = [1, 1]} : vector<2x96xf32> to vector<2x32xf32>
    %173 = vector.extract_strided_slice %122 {offsets = [0, 64], sizes = [2, 32], strides = [1, 1]} : vector<2x96xf32> to vector<2x32xf32>
    %174 = arith.addf %173, %46 : vector<2x32xf32>
    %175 = arith.mulf %163, %174 : vector<2x32xf32>
    %176 = arith.addf %172, %175 : vector<2x32xf32>
    %177 = math.tanh %176 : vector<2x32xf32>
    %cst_62 = arith.constant 1.000000e+00 : f32
    %178 = vector.broadcast %cst_62 : f32 to vector<2x32xf32>
    %179 = arith.subf %178, %171 : vector<2x32xf32>
    %180 = arith.mulf %179, %177 : vector<2x32xf32>
    %181 = arith.mulf %171, %116 : vector<2x32xf32>
    %182 = arith.addf %180, %181 : vector<2x32xf32>
    %183 = arith.truncf %151 : vector<2x32xf32> to vector<2x32xbf16>
    %c0_63 = arith.constant 0 : index
    %c0_64 = arith.constant 0 : index
    %184 = vector.load %arg6[%c0_63, %c0_64] : memref<32x96xbf16, #tpu.memory_space<vmem>>, vector<32x96xbf16>
    %cst_65 = arith.constant dense<0.000000e+00> : vector<2x96xf32>
    %185 = tpu.matmul %183, %184, %cst_65 {dimension_numbers = #tpu.dot_dimension_numbers<[1], [0], [0], [1], [0, 0, 1, 1], [], []>} : vector<2x32xbf16>, vector<32x96xbf16>, vector<2x96xf32> -> vector<2x96xf32>
    %186 = arith.truncf %182 : vector<2x32xf32> to vector<2x32xbf16>
    %c0_66 = arith.constant 0 : index
    %c0_67 = arith.constant 0 : index
    %187 = vector.load %arg10[%c0_66, %c0_67] : memref<32x96xbf16, #tpu.memory_space<vmem>>, vector<32x96xbf16>
    %cst_68 = arith.constant dense<0.000000e+00> : vector<2x96xf32>
    %188 = tpu.matmul %186, %187, %cst_68 {dimension_numbers = #tpu.dot_dimension_numbers<[1], [0], [0], [1], [0, 0, 1, 1], [], []>} : vector<2x32xbf16>, vector<32x96xbf16>, vector<2x96xf32> -> vector<2x96xf32>
    %189 = vector.extract_strided_slice %37 {offsets = [4, 0], sizes = [2, 96], strides = [1, 1]} : vector<16x96xf32> to vector<2x96xf32>
    %190 = arith.addf %189, %34 : vector<2x96xf32>
    %191 = vector.extract_strided_slice %190 {offsets = [0, 0], sizes = [2, 32], strides = [1, 1]} : vector<2x96xf32> to vector<2x32xf32>
    %192 = vector.extract_strided_slice %185 {offsets = [0, 0], sizes = [2, 32], strides = [1, 1]} : vector<2x96xf32> to vector<2x32xf32>
    %193 = arith.addf %191, %192 : vector<2x32xf32>
    %194 = arith.negf %193 : vector<2x32xf32>
    %195 = math.exp %194 : vector<2x32xf32>
    %cst_69 = arith.constant 1.000000e+00 : f32
    %196 = vector.broadcast %cst_69 : f32 to vector<2x32xf32>
    %197 = arith.addf %196, %195 : vector<2x32xf32>
    %198 = arith.divf %196, %197 : vector<2x32xf32>
    %199 = vector.extract_strided_slice %190 {offsets = [0, 32], sizes = [2, 32], strides = [1, 1]} : vector<2x96xf32> to vector<2x32xf32>
    %200 = vector.extract_strided_slice %185 {offsets = [0, 32], sizes = [2, 32], strides = [1, 1]} : vector<2x96xf32> to vector<2x32xf32>
    %201 = arith.addf %199, %200 : vector<2x32xf32>
    %202 = arith.negf %201 : vector<2x32xf32>
    %203 = math.exp %202 : vector<2x32xf32>
    %cst_70 = arith.constant 1.000000e+00 : f32
    %204 = vector.broadcast %cst_70 : f32 to vector<2x32xf32>
    %205 = arith.addf %204, %203 : vector<2x32xf32>
    %206 = arith.divf %204, %205 : vector<2x32xf32>
    %207 = vector.extract_strided_slice %190 {offsets = [0, 64], sizes = [2, 32], strides = [1, 1]} : vector<2x96xf32> to vector<2x32xf32>
    %208 = vector.extract_strided_slice %185 {offsets = [0, 64], sizes = [2, 32], strides = [1, 1]} : vector<2x96xf32> to vector<2x32xf32>
    %209 = arith.addf %208, %40 : vector<2x32xf32>
    %210 = arith.mulf %198, %209 : vector<2x32xf32>
    %211 = arith.addf %207, %210 : vector<2x32xf32>
    %212 = math.tanh %211 : vector<2x32xf32>
    %cst_71 = arith.constant 1.000000e+00 : f32
    %213 = vector.broadcast %cst_71 : f32 to vector<2x32xf32>
    %214 = arith.subf %213, %206 : vector<2x32xf32>
    %215 = arith.mulf %214, %212 : vector<2x32xf32>
    %216 = arith.mulf %206, %151 : vector<2x32xf32>
    %217 = arith.addf %215, %216 : vector<2x32xf32>
    %218 = arith.truncf %217 : vector<2x32xf32> to vector<2x32xbf16>
    %c0_72 = arith.constant 0 : index
    %c0_73 = arith.constant 0 : index
    %219 = vector.load %arg9[%c0_72, %c0_73] : memref<32x96xbf16, #tpu.memory_space<vmem>>, vector<32x96xbf16>
    %cst_74 = arith.constant dense<0.000000e+00> : vector<2x96xf32>
    %220 = tpu.matmul %218, %219, %cst_74 {dimension_numbers = #tpu.dot_dimension_numbers<[1], [0], [0], [1], [0, 0, 1, 1], [], []>} : vector<2x32xbf16>, vector<32x96xbf16>, vector<2x96xf32> -> vector<2x96xf32>
    %221 = arith.addf %220, %43 : vector<2x96xf32>
    %222 = vector.extract_strided_slice %221 {offsets = [0, 0], sizes = [2, 32], strides = [1, 1]} : vector<2x96xf32> to vector<2x32xf32>
    %223 = vector.extract_strided_slice %188 {offsets = [0, 0], sizes = [2, 32], strides = [1, 1]} : vector<2x96xf32> to vector<2x32xf32>
    %224 = arith.addf %222, %223 : vector<2x32xf32>
    %225 = arith.negf %224 : vector<2x32xf32>
    %226 = math.exp %225 : vector<2x32xf32>
    %cst_75 = arith.constant 1.000000e+00 : f32
    %227 = vector.broadcast %cst_75 : f32 to vector<2x32xf32>
    %228 = arith.addf %227, %226 : vector<2x32xf32>
    %229 = arith.divf %227, %228 : vector<2x32xf32>
    %230 = vector.extract_strided_slice %221 {offsets = [0, 32], sizes = [2, 32], strides = [1, 1]} : vector<2x96xf32> to vector<2x32xf32>
    %231 = vector.extract_strided_slice %188 {offsets = [0, 32], sizes = [2, 32], strides = [1, 1]} : vector<2x96xf32> to vector<2x32xf32>
    %232 = arith.addf %230, %231 : vector<2x32xf32>
    %233 = arith.negf %232 : vector<2x32xf32>
    %234 = math.exp %233 : vector<2x32xf32>
    %cst_76 = arith.constant 1.000000e+00 : f32
    %235 = vector.broadcast %cst_76 : f32 to vector<2x32xf32>
    %236 = arith.addf %235, %234 : vector<2x32xf32>
    %237 = arith.divf %235, %236 : vector<2x32xf32>
    %238 = vector.extract_strided_slice %221 {offsets = [0, 64], sizes = [2, 32], strides = [1, 1]} : vector<2x96xf32> to vector<2x32xf32>
    %239 = vector.extract_strided_slice %188 {offsets = [0, 64], sizes = [2, 32], strides = [1, 1]} : vector<2x96xf32> to vector<2x32xf32>
    %240 = arith.addf %239, %46 : vector<2x32xf32>
    %241 = arith.mulf %229, %240 : vector<2x32xf32>
    %242 = arith.addf %238, %241 : vector<2x32xf32>
    %243 = math.tanh %242 : vector<2x32xf32>
    %cst_77 = arith.constant 1.000000e+00 : f32
    %244 = vector.broadcast %cst_77 : f32 to vector<2x32xf32>
    %245 = arith.subf %244, %237 : vector<2x32xf32>
    %246 = arith.mulf %245, %243 : vector<2x32xf32>
    %247 = arith.mulf %237, %182 : vector<2x32xf32>
    %248 = arith.addf %246, %247 : vector<2x32xf32>
    %249 = arith.truncf %217 : vector<2x32xf32> to vector<2x32xbf16>
    %c0_78 = arith.constant 0 : index
    %c0_79 = arith.constant 0 : index
    %250 = vector.load %arg6[%c0_78, %c0_79] : memref<32x96xbf16, #tpu.memory_space<vmem>>, vector<32x96xbf16>
    %cst_80 = arith.constant dense<0.000000e+00> : vector<2x96xf32>
    %251 = tpu.matmul %249, %250, %cst_80 {dimension_numbers = #tpu.dot_dimension_numbers<[1], [0], [0], [1], [0, 0, 1, 1], [], []>} : vector<2x32xbf16>, vector<32x96xbf16>, vector<2x96xf32> -> vector<2x96xf32>
    %252 = arith.truncf %248 : vector<2x32xf32> to vector<2x32xbf16>
    %c0_81 = arith.constant 0 : index
    %c0_82 = arith.constant 0 : index
    %253 = vector.load %arg10[%c0_81, %c0_82] : memref<32x96xbf16, #tpu.memory_space<vmem>>, vector<32x96xbf16>
    %cst_83 = arith.constant dense<0.000000e+00> : vector<2x96xf32>
    %254 = tpu.matmul %252, %253, %cst_83 {dimension_numbers = #tpu.dot_dimension_numbers<[1], [0], [0], [1], [0, 0, 1, 1], [], []>} : vector<2x32xbf16>, vector<32x96xbf16>, vector<2x96xf32> -> vector<2x96xf32>
    %255 = vector.extract_strided_slice %37 {offsets = [6, 0], sizes = [2, 96], strides = [1, 1]} : vector<16x96xf32> to vector<2x96xf32>
    %256 = arith.addf %255, %34 : vector<2x96xf32>
    %257 = vector.extract_strided_slice %256 {offsets = [0, 0], sizes = [2, 32], strides = [1, 1]} : vector<2x96xf32> to vector<2x32xf32>
    %258 = vector.extract_strided_slice %251 {offsets = [0, 0], sizes = [2, 32], strides = [1, 1]} : vector<2x96xf32> to vector<2x32xf32>
    %259 = arith.addf %257, %258 : vector<2x32xf32>
    %260 = arith.negf %259 : vector<2x32xf32>
    %261 = math.exp %260 : vector<2x32xf32>
    %cst_84 = arith.constant 1.000000e+00 : f32
    %262 = vector.broadcast %cst_84 : f32 to vector<2x32xf32>
    %263 = arith.addf %262, %261 : vector<2x32xf32>
    %264 = arith.divf %262, %263 : vector<2x32xf32>
    %265 = vector.extract_strided_slice %256 {offsets = [0, 32], sizes = [2, 32], strides = [1, 1]} : vector<2x96xf32> to vector<2x32xf32>
    %266 = vector.extract_strided_slice %251 {offsets = [0, 32], sizes = [2, 32], strides = [1, 1]} : vector<2x96xf32> to vector<2x32xf32>
    %267 = arith.addf %265, %266 : vector<2x32xf32>
    %268 = arith.negf %267 : vector<2x32xf32>
    %269 = math.exp %268 : vector<2x32xf32>
    %cst_85 = arith.constant 1.000000e+00 : f32
    %270 = vector.broadcast %cst_85 : f32 to vector<2x32xf32>
    %271 = arith.addf %270, %269 : vector<2x32xf32>
    %272 = arith.divf %270, %271 : vector<2x32xf32>
    %273 = vector.extract_strided_slice %256 {offsets = [0, 64], sizes = [2, 32], strides = [1, 1]} : vector<2x96xf32> to vector<2x32xf32>
    %274 = vector.extract_strided_slice %251 {offsets = [0, 64], sizes = [2, 32], strides = [1, 1]} : vector<2x96xf32> to vector<2x32xf32>
    %275 = arith.addf %274, %40 : vector<2x32xf32>
    %276 = arith.mulf %264, %275 : vector<2x32xf32>
    %277 = arith.addf %273, %276 : vector<2x32xf32>
    %278 = math.tanh %277 : vector<2x32xf32>
    %cst_86 = arith.constant 1.000000e+00 : f32
    %279 = vector.broadcast %cst_86 : f32 to vector<2x32xf32>
    %280 = arith.subf %279, %272 : vector<2x32xf32>
    %281 = arith.mulf %280, %278 : vector<2x32xf32>
    %282 = arith.mulf %272, %217 : vector<2x32xf32>
    %283 = arith.addf %281, %282 : vector<2x32xf32>
    %284 = arith.truncf %283 : vector<2x32xf32> to vector<2x32xbf16>
    %c0_87 = arith.constant 0 : index
    %c0_88 = arith.constant 0 : index
    %285 = vector.load %arg9[%c0_87, %c0_88] : memref<32x96xbf16, #tpu.memory_space<vmem>>, vector<32x96xbf16>
    %cst_89 = arith.constant dense<0.000000e+00> : vector<2x96xf32>
    %286 = tpu.matmul %284, %285, %cst_89 {dimension_numbers = #tpu.dot_dimension_numbers<[1], [0], [0], [1], [0, 0, 1, 1], [], []>} : vector<2x32xbf16>, vector<32x96xbf16>, vector<2x96xf32> -> vector<2x96xf32>
    %287 = arith.addf %286, %43 : vector<2x96xf32>
    %288 = vector.extract_strided_slice %287 {offsets = [0, 0], sizes = [2, 32], strides = [1, 1]} : vector<2x96xf32> to vector<2x32xf32>
    %289 = vector.extract_strided_slice %254 {offsets = [0, 0], sizes = [2, 32], strides = [1, 1]} : vector<2x96xf32> to vector<2x32xf32>
    %290 = arith.addf %288, %289 : vector<2x32xf32>
    %291 = arith.negf %290 : vector<2x32xf32>
    %292 = math.exp %291 : vector<2x32xf32>
    %cst_90 = arith.constant 1.000000e+00 : f32
    %293 = vector.broadcast %cst_90 : f32 to vector<2x32xf32>
    %294 = arith.addf %293, %292 : vector<2x32xf32>
    %295 = arith.divf %293, %294 : vector<2x32xf32>
    %296 = vector.extract_strided_slice %287 {offsets = [0, 32], sizes = [2, 32], strides = [1, 1]} : vector<2x96xf32> to vector<2x32xf32>
    %297 = vector.extract_strided_slice %254 {offsets = [0, 32], sizes = [2, 32], strides = [1, 1]} : vector<2x96xf32> to vector<2x32xf32>
    %298 = arith.addf %296, %297 : vector<2x32xf32>
    %299 = arith.negf %298 : vector<2x32xf32>
    %300 = math.exp %299 : vector<2x32xf32>
    %cst_91 = arith.constant 1.000000e+00 : f32
    %301 = vector.broadcast %cst_91 : f32 to vector<2x32xf32>
    %302 = arith.addf %301, %300 : vector<2x32xf32>
    %303 = arith.divf %301, %302 : vector<2x32xf32>
    %304 = vector.extract_strided_slice %287 {offsets = [0, 64], sizes = [2, 32], strides = [1, 1]} : vector<2x96xf32> to vector<2x32xf32>
    %305 = vector.extract_strided_slice %254 {offsets = [0, 64], sizes = [2, 32], strides = [1, 1]} : vector<2x96xf32> to vector<2x32xf32>
    %306 = arith.addf %305, %46 : vector<2x32xf32>
    %307 = arith.mulf %295, %306 : vector<2x32xf32>
    %308 = arith.addf %304, %307 : vector<2x32xf32>
    %309 = math.tanh %308 : vector<2x32xf32>
    %cst_92 = arith.constant 1.000000e+00 : f32
    %310 = vector.broadcast %cst_92 : f32 to vector<2x32xf32>
    %311 = arith.subf %310, %303 : vector<2x32xf32>
    %312 = arith.mulf %311, %309 : vector<2x32xf32>
    %313 = arith.mulf %303, %248 : vector<2x32xf32>
    %314 = arith.addf %312, %313 : vector<2x32xf32>
    %315 = arith.truncf %283 : vector<2x32xf32> to vector<2x32xbf16>
    %c0_93 = arith.constant 0 : index
    %c0_94 = arith.constant 0 : index
    %316 = vector.load %arg6[%c0_93, %c0_94] : memref<32x96xbf16, #tpu.memory_space<vmem>>, vector<32x96xbf16>
    %cst_95 = arith.constant dense<0.000000e+00> : vector<2x96xf32>
    %317 = tpu.matmul %315, %316, %cst_95 {dimension_numbers = #tpu.dot_dimension_numbers<[1], [0], [0], [1], [0, 0, 1, 1], [], []>} : vector<2x32xbf16>, vector<32x96xbf16>, vector<2x96xf32> -> vector<2x96xf32>
    %318 = arith.truncf %314 : vector<2x32xf32> to vector<2x32xbf16>
    %c0_96 = arith.constant 0 : index
    %c0_97 = arith.constant 0 : index
    %319 = vector.load %arg10[%c0_96, %c0_97] : memref<32x96xbf16, #tpu.memory_space<vmem>>, vector<32x96xbf16>
    %cst_98 = arith.constant dense<0.000000e+00> : vector<2x96xf32>
    %320 = tpu.matmul %318, %319, %cst_98 {dimension_numbers = #tpu.dot_dimension_numbers<[1], [0], [0], [1], [0, 0, 1, 1], [], []>} : vector<2x32xbf16>, vector<32x96xbf16>, vector<2x96xf32> -> vector<2x96xf32>
    %321 = vector.extract_strided_slice %37 {offsets = [8, 0], sizes = [2, 96], strides = [1, 1]} : vector<16x96xf32> to vector<2x96xf32>
    %322 = arith.addf %321, %34 : vector<2x96xf32>
    %323 = vector.extract_strided_slice %322 {offsets = [0, 0], sizes = [2, 32], strides = [1, 1]} : vector<2x96xf32> to vector<2x32xf32>
    %324 = vector.extract_strided_slice %317 {offsets = [0, 0], sizes = [2, 32], strides = [1, 1]} : vector<2x96xf32> to vector<2x32xf32>
    %325 = arith.addf %323, %324 : vector<2x32xf32>
    %326 = arith.negf %325 : vector<2x32xf32>
    %327 = math.exp %326 : vector<2x32xf32>
    %cst_99 = arith.constant 1.000000e+00 : f32
    %328 = vector.broadcast %cst_99 : f32 to vector<2x32xf32>
    %329 = arith.addf %328, %327 : vector<2x32xf32>
    %330 = arith.divf %328, %329 : vector<2x32xf32>
    %331 = vector.extract_strided_slice %322 {offsets = [0, 32], sizes = [2, 32], strides = [1, 1]} : vector<2x96xf32> to vector<2x32xf32>
    %332 = vector.extract_strided_slice %317 {offsets = [0, 32], sizes = [2, 32], strides = [1, 1]} : vector<2x96xf32> to vector<2x32xf32>
    %333 = arith.addf %331, %332 : vector<2x32xf32>
    %334 = arith.negf %333 : vector<2x32xf32>
    %335 = math.exp %334 : vector<2x32xf32>
    %cst_100 = arith.constant 1.000000e+00 : f32
    %336 = vector.broadcast %cst_100 : f32 to vector<2x32xf32>
    %337 = arith.addf %336, %335 : vector<2x32xf32>
    %338 = arith.divf %336, %337 : vector<2x32xf32>
    %339 = vector.extract_strided_slice %322 {offsets = [0, 64], sizes = [2, 32], strides = [1, 1]} : vector<2x96xf32> to vector<2x32xf32>
    %340 = vector.extract_strided_slice %317 {offsets = [0, 64], sizes = [2, 32], strides = [1, 1]} : vector<2x96xf32> to vector<2x32xf32>
    %341 = arith.addf %340, %40 : vector<2x32xf32>
    %342 = arith.mulf %330, %341 : vector<2x32xf32>
    %343 = arith.addf %339, %342 : vector<2x32xf32>
    %344 = math.tanh %343 : vector<2x32xf32>
    %cst_101 = arith.constant 1.000000e+00 : f32
    %345 = vector.broadcast %cst_101 : f32 to vector<2x32xf32>
    %346 = arith.subf %345, %338 : vector<2x32xf32>
    %347 = arith.mulf %346, %344 : vector<2x32xf32>
    %348 = arith.mulf %338, %283 : vector<2x32xf32>
    %349 = arith.addf %347, %348 : vector<2x32xf32>
    %350 = arith.truncf %349 : vector<2x32xf32> to vector<2x32xbf16>
    %c0_102 = arith.constant 0 : index
    %c0_103 = arith.constant 0 : index
    %351 = vector.load %arg9[%c0_102, %c0_103] : memref<32x96xbf16, #tpu.memory_space<vmem>>, vector<32x96xbf16>
    %cst_104 = arith.constant dense<0.000000e+00> : vector<2x96xf32>
    %352 = tpu.matmul %350, %351, %cst_104 {dimension_numbers = #tpu.dot_dimension_numbers<[1], [0], [0], [1], [0, 0, 1, 1], [], []>} : vector<2x32xbf16>, vector<32x96xbf16>, vector<2x96xf32> -> vector<2x96xf32>
    %353 = arith.addf %352, %43 : vector<2x96xf32>
    %354 = vector.extract_strided_slice %353 {offsets = [0, 0], sizes = [2, 32], strides = [1, 1]} : vector<2x96xf32> to vector<2x32xf32>
    %355 = vector.extract_strided_slice %320 {offsets = [0, 0], sizes = [2, 32], strides = [1, 1]} : vector<2x96xf32> to vector<2x32xf32>
    %356 = arith.addf %354, %355 : vector<2x32xf32>
    %357 = arith.negf %356 : vector<2x32xf32>
    %358 = math.exp %357 : vector<2x32xf32>
    %cst_105 = arith.constant 1.000000e+00 : f32
    %359 = vector.broadcast %cst_105 : f32 to vector<2x32xf32>
    %360 = arith.addf %359, %358 : vector<2x32xf32>
    %361 = arith.divf %359, %360 : vector<2x32xf32>
    %362 = vector.extract_strided_slice %353 {offsets = [0, 32], sizes = [2, 32], strides = [1, 1]} : vector<2x96xf32> to vector<2x32xf32>
    %363 = vector.extract_strided_slice %320 {offsets = [0, 32], sizes = [2, 32], strides = [1, 1]} : vector<2x96xf32> to vector<2x32xf32>
    %364 = arith.addf %362, %363 : vector<2x32xf32>
    %365 = arith.negf %364 : vector<2x32xf32>
    %366 = math.exp %365 : vector<2x32xf32>
    %cst_106 = arith.constant 1.000000e+00 : f32
    %367 = vector.broadcast %cst_106 : f32 to vector<2x32xf32>
    %368 = arith.addf %367, %366 : vector<2x32xf32>
    %369 = arith.divf %367, %368 : vector<2x32xf32>
    %370 = vector.extract_strided_slice %353 {offsets = [0, 64], sizes = [2, 32], strides = [1, 1]} : vector<2x96xf32> to vector<2x32xf32>
    %371 = vector.extract_strided_slice %320 {offsets = [0, 64], sizes = [2, 32], strides = [1, 1]} : vector<2x96xf32> to vector<2x32xf32>
    %372 = arith.addf %371, %46 : vector<2x32xf32>
    %373 = arith.mulf %361, %372 : vector<2x32xf32>
    %374 = arith.addf %370, %373 : vector<2x32xf32>
    %375 = math.tanh %374 : vector<2x32xf32>
    %cst_107 = arith.constant 1.000000e+00 : f32
    %376 = vector.broadcast %cst_107 : f32 to vector<2x32xf32>
    %377 = arith.subf %376, %369 : vector<2x32xf32>
    %378 = arith.mulf %377, %375 : vector<2x32xf32>
    %379 = arith.mulf %369, %314 : vector<2x32xf32>
    %380 = arith.addf %378, %379 : vector<2x32xf32>
    %381 = arith.truncf %349 : vector<2x32xf32> to vector<2x32xbf16>
    %c0_108 = arith.constant 0 : index
    %c0_109 = arith.constant 0 : index
    %382 = vector.load %arg6[%c0_108, %c0_109] : memref<32x96xbf16, #tpu.memory_space<vmem>>, vector<32x96xbf16>
    %cst_110 = arith.constant dense<0.000000e+00> : vector<2x96xf32>
    %383 = tpu.matmul %381, %382, %cst_110 {dimension_numbers = #tpu.dot_dimension_numbers<[1], [0], [0], [1], [0, 0, 1, 1], [], []>} : vector<2x32xbf16>, vector<32x96xbf16>, vector<2x96xf32> -> vector<2x96xf32>
    %384 = arith.truncf %380 : vector<2x32xf32> to vector<2x32xbf16>
    %c0_111 = arith.constant 0 : index
    %c0_112 = arith.constant 0 : index
    %385 = vector.load %arg10[%c0_111, %c0_112] : memref<32x96xbf16, #tpu.memory_space<vmem>>, vector<32x96xbf16>
    %cst_113 = arith.constant dense<0.000000e+00> : vector<2x96xf32>
    %386 = tpu.matmul %384, %385, %cst_113 {dimension_numbers = #tpu.dot_dimension_numbers<[1], [0], [0], [1], [0, 0, 1, 1], [], []>} : vector<2x32xbf16>, vector<32x96xbf16>, vector<2x96xf32> -> vector<2x96xf32>
    %387 = vector.extract_strided_slice %37 {offsets = [10, 0], sizes = [2, 96], strides = [1, 1]} : vector<16x96xf32> to vector<2x96xf32>
    %388 = arith.addf %387, %34 : vector<2x96xf32>
    %389 = vector.extract_strided_slice %388 {offsets = [0, 0], sizes = [2, 32], strides = [1, 1]} : vector<2x96xf32> to vector<2x32xf32>
    %390 = vector.extract_strided_slice %383 {offsets = [0, 0], sizes = [2, 32], strides = [1, 1]} : vector<2x96xf32> to vector<2x32xf32>
    %391 = arith.addf %389, %390 : vector<2x32xf32>
    %392 = arith.negf %391 : vector<2x32xf32>
    %393 = math.exp %392 : vector<2x32xf32>
    %cst_114 = arith.constant 1.000000e+00 : f32
    %394 = vector.broadcast %cst_114 : f32 to vector<2x32xf32>
    %395 = arith.addf %394, %393 : vector<2x32xf32>
    %396 = arith.divf %394, %395 : vector<2x32xf32>
    %397 = vector.extract_strided_slice %388 {offsets = [0, 32], sizes = [2, 32], strides = [1, 1]} : vector<2x96xf32> to vector<2x32xf32>
    %398 = vector.extract_strided_slice %383 {offsets = [0, 32], sizes = [2, 32], strides = [1, 1]} : vector<2x96xf32> to vector<2x32xf32>
    %399 = arith.addf %397, %398 : vector<2x32xf32>
    %400 = arith.negf %399 : vector<2x32xf32>
    %401 = math.exp %400 : vector<2x32xf32>
    %cst_115 = arith.constant 1.000000e+00 : f32
    %402 = vector.broadcast %cst_115 : f32 to vector<2x32xf32>
    %403 = arith.addf %402, %401 : vector<2x32xf32>
    %404 = arith.divf %402, %403 : vector<2x32xf32>
    %405 = vector.extract_strided_slice %388 {offsets = [0, 64], sizes = [2, 32], strides = [1, 1]} : vector<2x96xf32> to vector<2x32xf32>
    %406 = vector.extract_strided_slice %383 {offsets = [0, 64], sizes = [2, 32], strides = [1, 1]} : vector<2x96xf32> to vector<2x32xf32>
    %407 = arith.addf %406, %40 : vector<2x32xf32>
    %408 = arith.mulf %396, %407 : vector<2x32xf32>
    %409 = arith.addf %405, %408 : vector<2x32xf32>
    %410 = math.tanh %409 : vector<2x32xf32>
    %cst_116 = arith.constant 1.000000e+00 : f32
    %411 = vector.broadcast %cst_116 : f32 to vector<2x32xf32>
    %412 = arith.subf %411, %404 : vector<2x32xf32>
    %413 = arith.mulf %412, %410 : vector<2x32xf32>
    %414 = arith.mulf %404, %349 : vector<2x32xf32>
    %415 = arith.addf %413, %414 : vector<2x32xf32>
    %416 = arith.truncf %415 : vector<2x32xf32> to vector<2x32xbf16>
    %c0_117 = arith.constant 0 : index
    %c0_118 = arith.constant 0 : index
    %417 = vector.load %arg9[%c0_117, %c0_118] : memref<32x96xbf16, #tpu.memory_space<vmem>>, vector<32x96xbf16>
    %cst_119 = arith.constant dense<0.000000e+00> : vector<2x96xf32>
    %418 = tpu.matmul %416, %417, %cst_119 {dimension_numbers = #tpu.dot_dimension_numbers<[1], [0], [0], [1], [0, 0, 1, 1], [], []>} : vector<2x32xbf16>, vector<32x96xbf16>, vector<2x96xf32> -> vector<2x96xf32>
    %419 = arith.addf %418, %43 : vector<2x96xf32>
    %420 = vector.extract_strided_slice %419 {offsets = [0, 0], sizes = [2, 32], strides = [1, 1]} : vector<2x96xf32> to vector<2x32xf32>
    %421 = vector.extract_strided_slice %386 {offsets = [0, 0], sizes = [2, 32], strides = [1, 1]} : vector<2x96xf32> to vector<2x32xf32>
    %422 = arith.addf %420, %421 : vector<2x32xf32>
    %423 = arith.negf %422 : vector<2x32xf32>
    %424 = math.exp %423 : vector<2x32xf32>
    %cst_120 = arith.constant 1.000000e+00 : f32
    %425 = vector.broadcast %cst_120 : f32 to vector<2x32xf32>
    %426 = arith.addf %425, %424 : vector<2x32xf32>
    %427 = arith.divf %425, %426 : vector<2x32xf32>
    %428 = vector.extract_strided_slice %419 {offsets = [0, 32], sizes = [2, 32], strides = [1, 1]} : vector<2x96xf32> to vector<2x32xf32>
    %429 = vector.extract_strided_slice %386 {offsets = [0, 32], sizes = [2, 32], strides = [1, 1]} : vector<2x96xf32> to vector<2x32xf32>
    %430 = arith.addf %428, %429 : vector<2x32xf32>
    %431 = arith.negf %430 : vector<2x32xf32>
    %432 = math.exp %431 : vector<2x32xf32>
    %cst_121 = arith.constant 1.000000e+00 : f32
    %433 = vector.broadcast %cst_121 : f32 to vector<2x32xf32>
    %434 = arith.addf %433, %432 : vector<2x32xf32>
    %435 = arith.divf %433, %434 : vector<2x32xf32>
    %436 = vector.extract_strided_slice %419 {offsets = [0, 64], sizes = [2, 32], strides = [1, 1]} : vector<2x96xf32> to vector<2x32xf32>
    %437 = vector.extract_strided_slice %386 {offsets = [0, 64], sizes = [2, 32], strides = [1, 1]} : vector<2x96xf32> to vector<2x32xf32>
    %438 = arith.addf %437, %46 : vector<2x32xf32>
    %439 = arith.mulf %427, %438 : vector<2x32xf32>
    %440 = arith.addf %436, %439 : vector<2x32xf32>
    %441 = math.tanh %440 : vector<2x32xf32>
    %cst_122 = arith.constant 1.000000e+00 : f32
    %442 = vector.broadcast %cst_122 : f32 to vector<2x32xf32>
    %443 = arith.subf %442, %435 : vector<2x32xf32>
    %444 = arith.mulf %443, %441 : vector<2x32xf32>
    %445 = arith.mulf %435, %380 : vector<2x32xf32>
    %446 = arith.addf %444, %445 : vector<2x32xf32>
    %447 = arith.truncf %415 : vector<2x32xf32> to vector<2x32xbf16>
    %c0_123 = arith.constant 0 : index
    %c0_124 = arith.constant 0 : index
    %448 = vector.load %arg6[%c0_123, %c0_124] : memref<32x96xbf16, #tpu.memory_space<vmem>>, vector<32x96xbf16>
    %cst_125 = arith.constant dense<0.000000e+00> : vector<2x96xf32>
    %449 = tpu.matmul %447, %448, %cst_125 {dimension_numbers = #tpu.dot_dimension_numbers<[1], [0], [0], [1], [0, 0, 1, 1], [], []>} : vector<2x32xbf16>, vector<32x96xbf16>, vector<2x96xf32> -> vector<2x96xf32>
    %450 = arith.truncf %446 : vector<2x32xf32> to vector<2x32xbf16>
    %c0_126 = arith.constant 0 : index
    %c0_127 = arith.constant 0 : index
    %451 = vector.load %arg10[%c0_126, %c0_127] : memref<32x96xbf16, #tpu.memory_space<vmem>>, vector<32x96xbf16>
    %cst_128 = arith.constant dense<0.000000e+00> : vector<2x96xf32>
    %452 = tpu.matmul %450, %451, %cst_128 {dimension_numbers = #tpu.dot_dimension_numbers<[1], [0], [0], [1], [0, 0, 1, 1], [], []>} : vector<2x32xbf16>, vector<32x96xbf16>, vector<2x96xf32> -> vector<2x96xf32>
    %453 = vector.extract_strided_slice %37 {offsets = [12, 0], sizes = [2, 96], strides = [1, 1]} : vector<16x96xf32> to vector<2x96xf32>
    %454 = arith.addf %453, %34 : vector<2x96xf32>
    %455 = vector.extract_strided_slice %454 {offsets = [0, 0], sizes = [2, 32], strides = [1, 1]} : vector<2x96xf32> to vector<2x32xf32>
    %456 = vector.extract_strided_slice %449 {offsets = [0, 0], sizes = [2, 32], strides = [1, 1]} : vector<2x96xf32> to vector<2x32xf32>
    %457 = arith.addf %455, %456 : vector<2x32xf32>
    %458 = arith.negf %457 : vector<2x32xf32>
    %459 = math.exp %458 : vector<2x32xf32>
    %cst_129 = arith.constant 1.000000e+00 : f32
    %460 = vector.broadcast %cst_129 : f32 to vector<2x32xf32>
    %461 = arith.addf %460, %459 : vector<2x32xf32>
    %462 = arith.divf %460, %461 : vector<2x32xf32>
    %463 = vector.extract_strided_slice %454 {offsets = [0, 32], sizes = [2, 32], strides = [1, 1]} : vector<2x96xf32> to vector<2x32xf32>
    %464 = vector.extract_strided_slice %449 {offsets = [0, 32], sizes = [2, 32], strides = [1, 1]} : vector<2x96xf32> to vector<2x32xf32>
    %465 = arith.addf %463, %464 : vector<2x32xf32>
    %466 = arith.negf %465 : vector<2x32xf32>
    %467 = math.exp %466 : vector<2x32xf32>
    %cst_130 = arith.constant 1.000000e+00 : f32
    %468 = vector.broadcast %cst_130 : f32 to vector<2x32xf32>
    %469 = arith.addf %468, %467 : vector<2x32xf32>
    %470 = arith.divf %468, %469 : vector<2x32xf32>
    %471 = vector.extract_strided_slice %454 {offsets = [0, 64], sizes = [2, 32], strides = [1, 1]} : vector<2x96xf32> to vector<2x32xf32>
    %472 = vector.extract_strided_slice %449 {offsets = [0, 64], sizes = [2, 32], strides = [1, 1]} : vector<2x96xf32> to vector<2x32xf32>
    %473 = arith.addf %472, %40 : vector<2x32xf32>
    %474 = arith.mulf %462, %473 : vector<2x32xf32>
    %475 = arith.addf %471, %474 : vector<2x32xf32>
    %476 = math.tanh %475 : vector<2x32xf32>
    %cst_131 = arith.constant 1.000000e+00 : f32
    %477 = vector.broadcast %cst_131 : f32 to vector<2x32xf32>
    %478 = arith.subf %477, %470 : vector<2x32xf32>
    %479 = arith.mulf %478, %476 : vector<2x32xf32>
    %480 = arith.mulf %470, %415 : vector<2x32xf32>
    %481 = arith.addf %479, %480 : vector<2x32xf32>
    %482 = arith.truncf %481 : vector<2x32xf32> to vector<2x32xbf16>
    %c0_132 = arith.constant 0 : index
    %c0_133 = arith.constant 0 : index
    %483 = vector.load %arg9[%c0_132, %c0_133] : memref<32x96xbf16, #tpu.memory_space<vmem>>, vector<32x96xbf16>
    %cst_134 = arith.constant dense<0.000000e+00> : vector<2x96xf32>
    %484 = tpu.matmul %482, %483, %cst_134 {dimension_numbers = #tpu.dot_dimension_numbers<[1], [0], [0], [1], [0, 0, 1, 1], [], []>} : vector<2x32xbf16>, vector<32x96xbf16>, vector<2x96xf32> -> vector<2x96xf32>
    %485 = arith.addf %484, %43 : vector<2x96xf32>
    %486 = vector.extract_strided_slice %485 {offsets = [0, 0], sizes = [2, 32], strides = [1, 1]} : vector<2x96xf32> to vector<2x32xf32>
    %487 = vector.extract_strided_slice %452 {offsets = [0, 0], sizes = [2, 32], strides = [1, 1]} : vector<2x96xf32> to vector<2x32xf32>
    %488 = arith.addf %486, %487 : vector<2x32xf32>
    %489 = arith.negf %488 : vector<2x32xf32>
    %490 = math.exp %489 : vector<2x32xf32>
    %cst_135 = arith.constant 1.000000e+00 : f32
    %491 = vector.broadcast %cst_135 : f32 to vector<2x32xf32>
    %492 = arith.addf %491, %490 : vector<2x32xf32>
    %493 = arith.divf %491, %492 : vector<2x32xf32>
    %494 = vector.extract_strided_slice %485 {offsets = [0, 32], sizes = [2, 32], strides = [1, 1]} : vector<2x96xf32> to vector<2x32xf32>
    %495 = vector.extract_strided_slice %452 {offsets = [0, 32], sizes = [2, 32], strides = [1, 1]} : vector<2x96xf32> to vector<2x32xf32>
    %496 = arith.addf %494, %495 : vector<2x32xf32>
    %497 = arith.negf %496 : vector<2x32xf32>
    %498 = math.exp %497 : vector<2x32xf32>
    %cst_136 = arith.constant 1.000000e+00 : f32
    %499 = vector.broadcast %cst_136 : f32 to vector<2x32xf32>
    %500 = arith.addf %499, %498 : vector<2x32xf32>
    %501 = arith.divf %499, %500 : vector<2x32xf32>
    %502 = vector.extract_strided_slice %485 {offsets = [0, 64], sizes = [2, 32], strides = [1, 1]} : vector<2x96xf32> to vector<2x32xf32>
    %503 = vector.extract_strided_slice %452 {offsets = [0, 64], sizes = [2, 32], strides = [1, 1]} : vector<2x96xf32> to vector<2x32xf32>
    %504 = arith.addf %503, %46 : vector<2x32xf32>
    %505 = arith.mulf %493, %504 : vector<2x32xf32>
    %506 = arith.addf %502, %505 : vector<2x32xf32>
    %507 = math.tanh %506 : vector<2x32xf32>
    %cst_137 = arith.constant 1.000000e+00 : f32
    %508 = vector.broadcast %cst_137 : f32 to vector<2x32xf32>
    %509 = arith.subf %508, %501 : vector<2x32xf32>
    %510 = arith.mulf %509, %507 : vector<2x32xf32>
    %511 = arith.mulf %501, %446 : vector<2x32xf32>
    %512 = arith.addf %510, %511 : vector<2x32xf32>
    %513 = arith.truncf %481 : vector<2x32xf32> to vector<2x32xbf16>
    %c0_138 = arith.constant 0 : index
    %c0_139 = arith.constant 0 : index
    %514 = vector.load %arg6[%c0_138, %c0_139] : memref<32x96xbf16, #tpu.memory_space<vmem>>, vector<32x96xbf16>
    %cst_140 = arith.constant dense<0.000000e+00> : vector<2x96xf32>
    %515 = tpu.matmul %513, %514, %cst_140 {dimension_numbers = #tpu.dot_dimension_numbers<[1], [0], [0], [1], [0, 0, 1, 1], [], []>} : vector<2x32xbf16>, vector<32x96xbf16>, vector<2x96xf32> -> vector<2x96xf32>
    %516 = arith.truncf %512 : vector<2x32xf32> to vector<2x32xbf16>
    %c0_141 = arith.constant 0 : index
    %c0_142 = arith.constant 0 : index
    %517 = vector.load %arg10[%c0_141, %c0_142] : memref<32x96xbf16, #tpu.memory_space<vmem>>, vector<32x96xbf16>
    %cst_143 = arith.constant dense<0.000000e+00> : vector<2x96xf32>
    %518 = tpu.matmul %516, %517, %cst_143 {dimension_numbers = #tpu.dot_dimension_numbers<[1], [0], [0], [1], [0, 0, 1, 1], [], []>} : vector<2x32xbf16>, vector<32x96xbf16>, vector<2x96xf32> -> vector<2x96xf32>
    %519 = vector.extract_strided_slice %37 {offsets = [14, 0], sizes = [2, 96], strides = [1, 1]} : vector<16x96xf32> to vector<2x96xf32>
    %520 = arith.addf %519, %34 : vector<2x96xf32>
    %521 = vector.extract_strided_slice %520 {offsets = [0, 0], sizes = [2, 32], strides = [1, 1]} : vector<2x96xf32> to vector<2x32xf32>
    %522 = vector.extract_strided_slice %515 {offsets = [0, 0], sizes = [2, 32], strides = [1, 1]} : vector<2x96xf32> to vector<2x32xf32>
    %523 = arith.addf %521, %522 : vector<2x32xf32>
    %524 = arith.negf %523 : vector<2x32xf32>
    %525 = math.exp %524 : vector<2x32xf32>
    %cst_144 = arith.constant 1.000000e+00 : f32
    %526 = vector.broadcast %cst_144 : f32 to vector<2x32xf32>
    %527 = arith.addf %526, %525 : vector<2x32xf32>
    %528 = arith.divf %526, %527 : vector<2x32xf32>
    %529 = vector.extract_strided_slice %520 {offsets = [0, 32], sizes = [2, 32], strides = [1, 1]} : vector<2x96xf32> to vector<2x32xf32>
    %530 = vector.extract_strided_slice %515 {offsets = [0, 32], sizes = [2, 32], strides = [1, 1]} : vector<2x96xf32> to vector<2x32xf32>
    %531 = arith.addf %529, %530 : vector<2x32xf32>
    %532 = arith.negf %531 : vector<2x32xf32>
    %533 = math.exp %532 : vector<2x32xf32>
    %cst_145 = arith.constant 1.000000e+00 : f32
    %534 = vector.broadcast %cst_145 : f32 to vector<2x32xf32>
    %535 = arith.addf %534, %533 : vector<2x32xf32>
    %536 = arith.divf %534, %535 : vector<2x32xf32>
    %537 = vector.extract_strided_slice %520 {offsets = [0, 64], sizes = [2, 32], strides = [1, 1]} : vector<2x96xf32> to vector<2x32xf32>
    %538 = vector.extract_strided_slice %515 {offsets = [0, 64], sizes = [2, 32], strides = [1, 1]} : vector<2x96xf32> to vector<2x32xf32>
    %539 = arith.addf %538, %40 : vector<2x32xf32>
    %540 = arith.mulf %528, %539 : vector<2x32xf32>
    %541 = arith.addf %537, %540 : vector<2x32xf32>
    %542 = math.tanh %541 : vector<2x32xf32>
    %cst_146 = arith.constant 1.000000e+00 : f32
    %543 = vector.broadcast %cst_146 : f32 to vector<2x32xf32>
    %544 = arith.subf %543, %536 : vector<2x32xf32>
    %545 = arith.mulf %544, %542 : vector<2x32xf32>
    %546 = arith.mulf %536, %481 : vector<2x32xf32>
    %547 = arith.addf %545, %546 : vector<2x32xf32>
    %548 = arith.truncf %547 : vector<2x32xf32> to vector<2x32xbf16>
    %c0_147 = arith.constant 0 : index
    %c0_148 = arith.constant 0 : index
    %549 = vector.load %arg9[%c0_147, %c0_148] : memref<32x96xbf16, #tpu.memory_space<vmem>>, vector<32x96xbf16>
    %cst_149 = arith.constant dense<0.000000e+00> : vector<2x96xf32>
    %550 = tpu.matmul %548, %549, %cst_149 {dimension_numbers = #tpu.dot_dimension_numbers<[1], [0], [0], [1], [0, 0, 1, 1], [], []>} : vector<2x32xbf16>, vector<32x96xbf16>, vector<2x96xf32> -> vector<2x96xf32>
    %551 = arith.addf %550, %43 : vector<2x96xf32>
    %552 = vector.extract_strided_slice %551 {offsets = [0, 0], sizes = [2, 32], strides = [1, 1]} : vector<2x96xf32> to vector<2x32xf32>
    %553 = vector.extract_strided_slice %518 {offsets = [0, 0], sizes = [2, 32], strides = [1, 1]} : vector<2x96xf32> to vector<2x32xf32>
    %554 = arith.addf %552, %553 : vector<2x32xf32>
    %555 = arith.negf %554 : vector<2x32xf32>
    %556 = math.exp %555 : vector<2x32xf32>
    %cst_150 = arith.constant 1.000000e+00 : f32
    %557 = vector.broadcast %cst_150 : f32 to vector<2x32xf32>
    %558 = arith.addf %557, %556 : vector<2x32xf32>
    %559 = arith.divf %557, %558 : vector<2x32xf32>
    %560 = vector.extract_strided_slice %551 {offsets = [0, 32], sizes = [2, 32], strides = [1, 1]} : vector<2x96xf32> to vector<2x32xf32>
    %561 = vector.extract_strided_slice %518 {offsets = [0, 32], sizes = [2, 32], strides = [1, 1]} : vector<2x96xf32> to vector<2x32xf32>
    %562 = arith.addf %560, %561 : vector<2x32xf32>
    %563 = arith.negf %562 : vector<2x32xf32>
    %564 = math.exp %563 : vector<2x32xf32>
    %cst_151 = arith.constant 1.000000e+00 : f32
    %565 = vector.broadcast %cst_151 : f32 to vector<2x32xf32>
    %566 = arith.addf %565, %564 : vector<2x32xf32>
    %567 = arith.divf %565, %566 : vector<2x32xf32>
    %568 = vector.extract_strided_slice %551 {offsets = [0, 64], sizes = [2, 32], strides = [1, 1]} : vector<2x96xf32> to vector<2x32xf32>
    %569 = vector.extract_strided_slice %518 {offsets = [0, 64], sizes = [2, 32], strides = [1, 1]} : vector<2x96xf32> to vector<2x32xf32>
    %570 = arith.addf %569, %46 : vector<2x32xf32>
    %571 = arith.mulf %559, %570 : vector<2x32xf32>
    %572 = arith.addf %568, %571 : vector<2x32xf32>
    %573 = math.tanh %572 : vector<2x32xf32>
    %cst_152 = arith.constant 1.000000e+00 : f32
    %574 = vector.broadcast %cst_152 : f32 to vector<2x32xf32>
    %575 = arith.subf %574, %567 : vector<2x32xf32>
    %576 = arith.mulf %575, %573 : vector<2x32xf32>
    %577 = arith.mulf %567, %512 : vector<2x32xf32>
    %578 = arith.addf %576, %577 : vector<2x32xf32>
    %c0_153 = arith.constant 0 : index
    %c0_154 = arith.constant 0 : index
    %c0_155 = arith.constant 0 : index
    %579 = vector.load %arg16[%c0_153, %c0_154, %c0_155] : memref<2x2x32xf32, #tpu.memory_space<vmem>>, vector<1x2x32xf32>
    %580 = vector.shape_cast %579 : vector<1x2x32xf32> to vector<2x32xf32>
    %581 = vector.shape_cast %547 : vector<2x32xf32> to vector<1x2x32xf32>
    tpu.vector_store %arg16[%c0_153, %c0_154, %c0_155], %581 {strides = array<i32>} : memref<2x2x32xf32, #tpu.memory_space<vmem>>, vector<1x2x32xf32>,
    %c1_156 = arith.constant 1 : index
    %c0_157 = arith.constant 0 : index
    %c0_158 = arith.constant 0 : index
    %582 = vector.load %arg16[%c1_156, %c0_157, %c0_158] : memref<2x2x32xf32, #tpu.memory_space<vmem>>, vector<1x2x32xf32>
    %583 = vector.shape_cast %582 : vector<1x2x32xf32> to vector<2x32xf32>
    %584 = vector.shape_cast %578 : vector<2x32xf32> to vector<1x2x32xf32>
    tpu.vector_store %arg16[%c1_156, %c0_157, %c0_158], %584 {strides = array<i32>} : memref<2x2x32xf32, #tpu.memory_space<vmem>>, vector<1x2x32xf32>,
    %585 = tpu.concatenate %116, %182, %248, %314, %380, %446, %512, %578 in 0 : vector<2x32xf32>, vector<2x32xf32>, vector<2x32xf32>, vector<2x32xf32>, vector<2x32xf32>, vector<2x32xf32>, vector<2x32xf32>, vector<2x32xf32> -> vector<16x32xf32>
    %586 = arith.truncf %585 : vector<16x32xf32> to vector<16x32xbf16>
    %c0_159 = arith.constant 0 : index
    %c0_160 = arith.constant 0 : index
    %587 = vector.load %arg13[%c0_159, %c0_160] : memref<32x128xbf16, #tpu.memory_space<vmem>>, vector<32x128xbf16>
    %cst_161 = arith.constant dense<0.000000e+00> : vector<16x128xf32>
    %588 = tpu.matmul %586, %587, %cst_161 {dimension_numbers = #tpu.dot_dimension_numbers<[1], [0], [0], [1], [0, 0, 1, 1], [], []>} : vector<16x32xbf16>, vector<32x128xbf16>, vector<16x128xf32> -> vector<16x128xf32>
    %c0_162 = arith.constant 0 : index
    %c0_163 = arith.constant 0 : index
    %589 = vector.load %arg14[%c0_162, %c0_163] : memref<1x128xf32, #tpu.memory_space<vmem>>, vector<1x128xf32>
    %590 = vector.broadcast %589 : vector<1x128xf32> to vector<16x128xf32>
    %591 = arith.addf %588, %590 : vector<16x128xf32>
    %c0_164 = arith.constant 0 : index
    %c0_165 = arith.constant 0 : index
    %592 = vector.load %arg15[%c0_164, %c0_165] : memref<16x128xf32, #tpu.memory_space<vmem>>, vector<16x128xf32>
    tpu.vector_store %arg15[%c0_164, %c0_165], %591 {strides = array<i32>} : memref<16x128xf32, #tpu.memory_space<vmem>>, vector<16x128xf32>,
    return
  }
}

</mosaic_0001>

<llo_original>
// kernel: tpu_custom_call.1
$region0: #{tpu_custom_call.1}
  #allocation0 [shape = 'u32[]', space=smem, size = 0x4, offset = 0x4, fixed_abs, tag = 'smem constant byte address 0x4 - core index']
  #allocation1 [shape = 'u32[72,128]{1,0:T(1,128)}', space=vmem, size = 0x9000, scoped, tag = 'internal scratch']
  %s0 = inlined_call_operand.hbm [shape: bf16[16,16], index: 0, kind: input, shape index: {}]
  %s1 = inlined_call_operand.hbm [shape: bf16[2,8,32], index: 1, kind: input, shape index: {}]
  %s2 = inlined_call_operand.hbm [shape: f32[2,2,32], index: 2, kind: input, shape index: {}]
  %s3 = inlined_call_operand.vmem [shape: s32[2,1], index: 3, kind: input, shape index: {}]
  %s4 = inlined_call_operand.hbm [shape: bf16[16,96], index: 4, kind: input, shape index: {}]
  %s5 = inlined_call_operand.hbm [shape: bf16[32,96], index: 5, kind: input, shape index: {}]
  %s6 = inlined_call_operand.hbm [shape: bf16[32,96], index: 6, kind: input, shape index: {}]
  %s7 = inlined_call_operand.vmem [shape: f32[1,96], index: 7, kind: input, shape index: {}]
  %s8 = inlined_call_operand.vmem [shape: f32[1,32], index: 8, kind: input, shape index: {}]
  %s9 = inlined_call_operand.hbm [shape: bf16[32,96], index: 9, kind: input, shape index: {}]
  %s10 = inlined_call_operand.hbm [shape: bf16[32,96], index: 10, kind: input, shape index: {}]
  %s11 = inlined_call_operand.vmem [shape: f32[1,96], index: 11, kind: input, shape index: {}]
  %s12 = inlined_call_operand.vmem [shape: f32[1,32], index: 12, kind: input, shape index: {}]
  %s13 = inlined_call_operand.hbm [shape: bf16[32,128], index: 13, kind: input, shape index: {}]
  %s14 = inlined_call_operand.vmem [shape: f32[1,128], index: 14, kind: input, shape index: {}]
  %s15 = inlined_call_operand.hbm [shape: f32[16,128], index: 15, kind: output, shape index: {0}]
  %s16 = inlined_call_operand.hbm [shape: f32[2,2,32], index: 16, kind: output, shape index: {1}]
  %17 = xla_tuple %s15, %s16
  %s18 = sld [smem:[#allocation0]]
  $region114: #{tpu_custom_call.1} parent=0
    _
  %s20 = ssub.s32 1, %s18
  %s21 = scalar_select 0, %s20, %s18
  $region1: #{tpu_custom_call.1} parent=0
    #allocation2 [shape = 'u8[4096]{0}', space=vmem, size = 0x1000, scoped, tag = 'input window, operand 0, single buffered']
    #allocation3 [shape = 's32[1]{0}', space=sflag, size = 0x4, scoped, tag = 'scoped memory for tpu_custom_call.1']
    #allocation4 [shape = 's32[1]{0}', space=sflag, size = 0x4, scoped, tag = 'scoped memory for tpu_custom_call.1']
    #allocation5 [shape = 'u8[4096]{0}', space=vmem, size = 0x1000, scoped, tag = 'input window, operand 1, single buffered']
    #allocation6 [shape = 's32[1]{0}', space=sflag, size = 0x4, scoped, tag = 'scoped memory for tpu_custom_call.1']
    #allocation7 [shape = 'u8[2048]{0}', space=vmem, size = 0x800, scoped, tag = 'input window, operand 2, single buffered']
    #allocation8 [shape = 'u8[4096]{0}', space=vmem, size = 0x1000, scoped, tag = 'input window, operand 4, single buffered']
    #allocation9 [shape = 's32[1]{0}', space=sflag, size = 0x4, scoped, tag = 'scoped memory for tpu_custom_call.1']
    #allocation10 [shape = 'u8[8192]{0}', space=vmem, size = 0x2000, scoped, tag = 'input window, operand 5, single buffered']
    #allocation11 [shape = 'u8[8192]{0}', space=vmem, size = 0x2000, scoped, tag = 'input window, operand 6, single buffered']
    #allocation12 [shape = 's32[1]{0}', space=sflag, size = 0x4, scoped, tag = 'scoped memory for tpu_custom_call.1']
    #allocation13 [shape = 'u8[8192]{0}', space=vmem, size = 0x2000, scoped, tag = 'input window, operand 9, single buffered']
    #allocation14 [shape = 'u8[8192]{0}', space=vmem, size = 0x2000, scoped, tag = 'input window, operand 10, single buffered']
    #allocation15 [shape = 's32[1]{0}', space=sflag, size = 0x4, scoped, tag = 'scoped memory for tpu_custom_call.1']
    #allocation16 [shape = 'u8[8192]{0}', space=vmem, size = 0x2000, scoped, tag = 'input window, operand 13, single buffered']
    #allocation17 [shape = 'u8[8192]{0}', space=vmem, size = 0x2000, scoped, tag = 'output window, operand 0, single buffered']
    #allocation18 [shape = 'u8[2048]{0}', space=vmem, size = 0x800, scoped, tag = 'output window, operand 1, single buffered']
    #allocation19 [shape = 's32[1]{0}', space=sflag, size = 0x4, scoped, tag = 'scoped memory for tpu_custom_call.1']
    %22 = vsyncpa [#allocation3], 0
    %23 = vsyncpa [#allocation6], 0
    %24 = vsyncpa [#allocation9], 0
    %25 = vsyncpa [#allocation12], 0
    %26 = vsyncpa [#allocation15], 0
    %27 = vsyncpa [#allocation4], 0
    %28 = vsyncpa [#allocation19], 0
    // Predicated region
    $region2: #{tpu_custom_call.1} parent=1 // pred_check
      _
    $region3: #{tpu_custom_call.1} parent=1 // pred_check_branch
      %30 = sbr.rel (0) target = $region5
    $region4: #{tpu_custom_call.1} parent=1 // pred_region
      %32 = vsyncadd [#allocation3], 0
      %s33 = sshll.u32 %s0, 4
      %s34 = int_to_ptr.hbm [resolvable:$true] %s33
      %s35 = sshll.u32 [#allocation2], 4
      %s36 = int_to_ptr.vmem [resolvable:$true] %s35
      %41 = dma.hbm_to_vmem [thread:$0]  %s34, 128, %s36, [#allocation3], 64, 64, 4
    $region5: #{tpu_custom_call.1} parent=1 // pred_fallthru
      _
    // Predicated region
    $region6: #{tpu_custom_call.1} parent=1 // pred_check
      _
    $region7: #{tpu_custom_call.1} parent=1 // pred_check_branch
      %43 = sbr.rel (0) target = $region9
    $region8: #{tpu_custom_call.1} parent=1 // pred_region
      %45 = vsyncadd [#allocation6], 0
      %s46 = sshll.u32 %s1, 4
      %s47 = int_to_ptr.hbm [resolvable:$true] %s46
      %s48 = sshll.u32 [#allocation5], 4
      %s49 = int_to_ptr.vmem [resolvable:$true] %s48
      %54 = dma.hbm_to_vmem [thread:$0]  %s47, 128, %s49, [#allocation6], 64, 64, 4
    $region9: #{tpu_custom_call.1} parent=1 // pred_fallthru
      _
    // Predicated region
    $region10: #{tpu_custom_call.1} parent=1 // pred_check
      _
    $region11: #{tpu_custom_call.1} parent=1 // pred_check_branch
      %56 = sbr.rel (0) target = $region13
    $region12: #{tpu_custom_call.1} parent=1 // pred_region
      %58 = vsyncadd [#allocation6], 0
      %s59 = sshll.u32 %s2, 4
      %s60 = int_to_ptr.hbm [resolvable:$true] %s59
      %s61 = sshll.u32 [#allocation7], 4
      %s62 = int_to_ptr.vmem [resolvable:$true] %s61
      %67 = dma.hbm_to_vmem [thread:$0]  %s60, 64, %s62, [#allocation6], 32, 32, 2
    $region13: #{tpu_custom_call.1} parent=1 // pred_fallthru
      _
    // Predicated region
    $region14: #{tpu_custom_call.1} parent=1 // pred_check
      _
    $region15: #{tpu_custom_call.1} parent=1 // pred_check_branch
      %69 = sbr.rel (0) target = $region17
    $region16: #{tpu_custom_call.1} parent=1 // pred_region
      _
    $region17: #{tpu_custom_call.1} parent=1 // pred_fallthru
      _
    // Predicated region
    $region18: #{tpu_custom_call.1} parent=1 // pred_check
      _
    $region19: #{tpu_custom_call.1} parent=1 // pred_check_branch
      %71 = sbr.rel (0) target = $region21
    $region20: #{tpu_custom_call.1} parent=1 // pred_region
      %73 = vsyncadd [#allocation9], 0
      %s74 = sshll.u32 %s4, 4
      %s75 = int_to_ptr.hbm [resolvable:$true] %s74
      %s76 = sshll.u32 [#allocation8], 4
      %s77 = int_to_ptr.vmem [resolvable:$true] %s76
      %82 = dma.hbm_to_vmem [thread:$0]  %s75, 128, %s77, [#allocation9], 64, 64, 4
    $region21: #{tpu_custom_call.1} parent=1 // pred_fallthru
      _
    // Predicated region
    $region22: #{tpu_custom_call.1} parent=1 // pred_check
      _
    $region23: #{tpu_custom_call.1} parent=1 // pred_check_branch
      %84 = sbr.rel (0) target = $region25
    $region24: #{tpu_custom_call.1} parent=1 // pred_region
      %86 = vsyncadd [#allocation9], 0
      %s87 = sshll.u32 %s5, 4
      %s88 = int_to_ptr.hbm [resolvable:$true] %s87
      %s89 = sshll.u32 [#allocation10], 4
      %s90 = int_to_ptr.vmem [resolvable:$true] %s89
      %95 = dma.hbm_to_vmem [thread:$0]  %s88, 256, %s90, [#allocation9], 64, 64, 4
    $region25: #{tpu_custom_call.1} parent=1 // pred_fallthru
      _
    // Predicated region
    $region26: #{tpu_custom_call.1} parent=1 // pred_check
      _
    $region27: #{tpu_custom_call.1} parent=1 // pred_check_branch
      %97 = sbr.rel (0) target = $region29
    $region28: #{tpu_custom_call.1} parent=1 // pred_region
      %99 = vsyncadd [#allocation12], 0
      %s100 = sshll.u32 %s6, 4
      %s101 = int_to_ptr.hbm [resolvable:$true] %s100
      %s102 = sshll.u32 [#allocation11], 4
      %s103 = int_to_ptr.vmem [resolvable:$true] %s102
      %108 = dma.hbm_to_vmem [thread:$0]  %s101, 256, %s103, [#allocation12], 64, 64, 4
    $region29: #{tpu_custom_call.1} parent=1 // pred_fallthru
      _
    // Predicated region
    $region30: #{tpu_custom_call.1} parent=1 // pred_check
      _
    $region31: #{tpu_custom_call.1} parent=1 // pred_check_branch
      %110 = sbr.rel (0) target = $region33
    $region32: #{tpu_custom_call.1} parent=1 // pred_region
      _
    $region33: #{tpu_custom_call.1} parent=1 // pred_fallthru
      _
    // Predicated region
    $region34: #{tpu_custom_call.1} parent=1 // pred_check
      _
    $region35: #{tpu_custom_call.1} parent=1 // pred_check_branch
      %112 = sbr.rel (0) target = $region37
    $region36: #{tpu_custom_call.1} parent=1 // pred_region
      _
    $region37: #{tpu_custom_call.1} parent=1 // pred_fallthru
      _
    // Predicated region
    $region38: #{tpu_custom_call.1} parent=1 // pred_check
      _
    $region39: #{tpu_custom_call.1} parent=1 // pred_check_branch
      %114 = sbr.rel (0) target = $region41
    $region40: #{tpu_custom_call.1} parent=1 // pred_region
      %116 = vsyncadd [#allocation12], 0
      %s117 = sshll.u32 %s9, 4
      %s118 = int_to_ptr.hbm [resolvable:$true] %s117
      %s119 = sshll.u32 [#allocation13], 4
      %s120 = int_to_ptr.vmem [resolvable:$true] %s119
      %125 = dma.hbm_to_vmem [thread:$0]  %s118, 256, %s120, [#allocation12], 64, 64, 4
    $region41: #{tpu_custom_call.1} parent=1 // pred_fallthru
      _
    // Predicated region
    $region42: #{tpu_custom_call.1} parent=1 // pred_check
      _
    $region43: #{tpu_custom_call.1} parent=1 // pred_check_branch
      %127 = sbr.rel (0) target = $region45
    $region44: #{tpu_custom_call.1} parent=1 // pred_region
      %129 = vsyncadd [#allocation15], 0
      %s130 = sshll.u32 %s10, 4
      %s131 = int_to_ptr.hbm [resolvable:$true] %s130
      %s132 = sshll.u32 [#allocation14], 4
      %s133 = int_to_ptr.vmem [resolvable:$true] %s132
      %138 = dma.hbm_to_vmem [thread:$0]  %s131, 256, %s133, [#allocation15], 64, 64, 4
    $region45: #{tpu_custom_call.1} parent=1 // pred_fallthru
      _
    // Predicated region
    $region46: #{tpu_custom_call.1} parent=1 // pred_check
      _
    $region47: #{tpu_custom_call.1} parent=1 // pred_check_branch
      %140 = sbr.rel (0) target = $region49
    $region48: #{tpu_custom_call.1} parent=1 // pred_region
      _
    $region49: #{tpu_custom_call.1} parent=1 // pred_fallthru
      _
    // Predicated region
    $region50: #{tpu_custom_call.1} parent=1 // pred_check
      _
    $region51: #{tpu_custom_call.1} parent=1 // pred_check_branch
      %142 = sbr.rel (0) target = $region53
    $region52: #{tpu_custom_call.1} parent=1 // pred_region
      _
    $region53: #{tpu_custom_call.1} parent=1 // pred_fallthru
      _
    // Predicated region
    $region54: #{tpu_custom_call.1} parent=1 // pred_check
      _
    $region55: #{tpu_custom_call.1} parent=1 // pred_check_branch
      %144 = sbr.rel (0) target = $region57
    $region56: #{tpu_custom_call.1} parent=1 // pred_region
      %146 = vsyncadd [#allocation15], 0
      %s147 = sshll.u32 %s13, 4
      %s148 = int_to_ptr.hbm [resolvable:$true] %s147
      %s149 = sshll.u32 [#allocation16], 4
      %s150 = int_to_ptr.vmem [resolvable:$true] %s149
      %155 = dma.hbm_to_vmem [thread:$0]  %s148, 256, %s150, [#allocation15], 64, 64, 4
    $region57: #{tpu_custom_call.1} parent=1 // pred_fallthru
      _
    // Predicated region
    $region58: #{tpu_custom_call.1} parent=1 // pred_check
      _
    $region59: #{tpu_custom_call.1} parent=1 // pred_check_branch
      %157 = sbr.rel (0) target = $region61
    $region60: #{tpu_custom_call.1} parent=1 // pred_region
      _
    $region61: #{tpu_custom_call.1} parent=1 // pred_fallthru
      _
    // Predicated region
    $region62: #{tpu_custom_call.1} parent=1 // pred_check
      _
    $region63: #{tpu_custom_call.1} parent=1 // pred_check_branch
      %159 = sbr.rel (0) target = $region65
    $region64: #{tpu_custom_call.1} parent=1 // pred_region
      %161 = dma.done [#allocation3], 128
    $region65: #{tpu_custom_call.1} parent=1 // pred_fallthru
      _
    // Predicated region
    $region66: #{tpu_custom_call.1} parent=1 // pred_check
      _
    $region67: #{tpu_custom_call.1} parent=1 // pred_check_branch
      %163 = sbr.rel (0) target = $region69
    $region68: #{tpu_custom_call.1} parent=1 // pred_region
      %165 = dma.done [#allocation6], 128
    $region69: #{tpu_custom_call.1} parent=1 // pred_fallthru
      _
    // Predicated region
    $region70: #{tpu_custom_call.1} parent=1 // pred_check
      _
    $region71: #{tpu_custom_call.1} parent=1 // pred_check_branch
      %167 = sbr.rel (0) target = $region73
    $region72: #{tpu_custom_call.1} parent=1 // pred_region
      %169 = dma.done [#allocation6], 64
    $region73: #{tpu_custom_call.1} parent=1 // pred_fallthru
      _
    // Predicated region
    $region74: #{tpu_custom_call.1} parent=1 // pred_check
      _
    $region75: #{tpu_custom_call.1} parent=1 // pred_check_branch
      %171 = sbr.rel (0) target = $region77
    $region76: #{tpu_custom_call.1} parent=1 // pred_region
      %173 = dma.done [#allocation9], 128
    $region77: #{tpu_custom_call.1} parent=1 // pred_fallthru
      _
    // Predicated region
    $region78: #{tpu_custom_call.1} parent=1 // pred_check
      _
    $region79: #{tpu_custom_call.1} parent=1 // pred_check_branch
      %175 = sbr.rel (0) target = $region81
    $region80: #{tpu_custom_call.1} parent=1 // pred_region
      %177 = dma.done [#allocation9], 256
    $region81: #{tpu_custom_call.1} parent=1 // pred_fallthru
      _
    // Predicated region
    $region82: #{tpu_custom_call.1} parent=1 // pred_check
      _
    $region83: #{tpu_custom_call.1} parent=1 // pred_check_branch
      %179 = sbr.rel (0) target = $region85
    $region84: #{tpu_custom_call.1} parent=1 // pred_region
      %181 = dma.done [#allocation12], 256
    $region85: #{tpu_custom_call.1} parent=1 // pred_fallthru
      _
    // Predicated region
    $region86: #{tpu_custom_call.1} parent=1 // pred_check
      _
    $region87: #{tpu_custom_call.1} parent=1 // pred_check_branch
      %183 = sbr.rel (0) target = $region89
    $region88: #{tpu_custom_call.1} parent=1 // pred_region
      %185 = dma.done [#allocation12], 256
    $region89: #{tpu_custom_call.1} parent=1 // pred_fallthru
      _
    // Predicated region
    $region90: #{tpu_custom_call.1} parent=1 // pred_check
      _
    $region91: #{tpu_custom_call.1} parent=1 // pred_check_branch
      %187 = sbr.rel (0) target = $region93
    $region92: #{tpu_custom_call.1} parent=1 // pred_region
      %189 = dma.done [#allocation15], 256
    $region93: #{tpu_custom_call.1} parent=1 // pred_fallthru
      _
    // Predicated region
    $region94: #{tpu_custom_call.1} parent=1 // pred_check
      _
    $region95: #{tpu_custom_call.1} parent=1 // pred_check_branch
      %191 = sbr.rel (0) target = $region97
    $region96: #{tpu_custom_call.1} parent=1 // pred_region
      %193 = dma.done [#allocation15], 256
    $region97: #{tpu_custom_call.1} parent=1 // pred_fallthru
      _
    %v195 = vld [vmem:[#allocation5] sm:$0xf]
    %v196 = vld [vmem:[#allocation5 + $0x4] sm:$0xf]
    %s197 = scalar_lea.vmem [#allocation7], 2
    %v198 = vld [vmem:[%s197] sm:$0x3]
    %v199 = vpack.c.bf16 %v198, %v198
    %v201 = vrot.slane %v199, 3
    %vm202 = vcmask 1040384
    %v205 = vsel %vm202, %v199, %v201
    %v207 = vunpack.i.l.s16 %v205
    %v208 = vunpack.i.h.s16 %v205
    %v209 = vpack.i.b16 %v207, %v207
    %v210 = vperm.slane %v209, 0
    %vm211 = vcmask 261120
    %v213 = vsel %vm211, %v210, 0
    %v216 = vsel %vm211, %v195, 0
    %218 = vmatpush.bf16.xpose.msra.mxu0 0
    %219 = vmatpush.bf16.xpose.msra.mxu0 0
    %220 = vmatpush.bf16.xpose.msra.mxu0 0
    %221 = vmatpush.bf16.xpose.msra.mxu0 0
    %222 = vmatpush.bf16.xpose.msra.mxu0 0
    %223 = vmatpush.bf16.xpose.msra.mxu0 0
    %224 = vmatpush.bf16.xpose.msra.mxu0 0
    %225 = vmatpush.bf16.xpose.msra.mxu0 %v216
    %226 = vmatmul.bf16.gmra.mxu0 %v213
    %v227 = vpop.f32.mrf.mxu0
    %v228 = vadd.f32 0.0, %v227
    %v229 = vpop.f32.mrf.mxu0
    %230 = vdwg.mxu0
    %v231 = vpack.i.b16 %v208, %v208
    %v232 = vperm.slane %v231, 0
    %v234 = vsel %vm211, %v232, 0
    %v237 = vsel %vm211, %v196, 0
    %239 = vmatpush.bf16.xpose.msra.mxu0 0
    %240 = vmatpush.bf16.xpose.msra.mxu0 0
    %241 = vmatpush.bf16.xpose.msra.mxu0 0
    %242 = vmatpush.bf16.xpose.msra.mxu0 0
    %243 = vmatpush.bf16.xpose.msra.mxu0 0
    %244 = vmatpush.bf16.xpose.msra.mxu0 0
    %245 = vmatpush.bf16.xpose.msra.mxu0 0
    %246 = vmatpush.bf16.xpose.msra.mxu0 %v237
    %247 = vmatmul.bf16.gmra.mxu0 %v234
    %v248 = vpop.f32.mrf.mxu0
    %v249 = vadd.f32 0.0, %v248
    %v250 = vpop.f32.mrf.mxu0
    %251 = vdwg.mxu0
    %v252 = vmul.f32 %v228, 0.17677669
    %v253 = vmul.f32 %v249, 0.17677669
    %v254 = vlaneseq
    %v255 = vand.u32 %v254, 127
    %v256 = vld [vmem:[%s3] sm:$0x3]
    %257 = vset.pattern.permute.xlu0 0
    %258 = vperm.xlu0 %257, %v256
    %v259 = vpop.permute.xlu0 %258
    %vm260 = vcmp.lt.s32.totalorder %v255, %v259
    %v263 = vrot.slane %v253, 7
    %vm264 = vcmask 1041409
    %v265 = vsel %vm264, %v263, %v252
    %v267 = vsel %vm260, %v265, -1e+09
    %vm268 = vcmask 58368
    %v269 = vsel %vm268, %v267, -inf
    %270 = vmax.xlane.f32.xlu0 %v269
    %v271 = vpop.xlane.xlu0 %270
    %v272 = vsub.f32 %v267, %v271
    %v273 = vmul.f32 %v272, 1.442695
    %v274 = vpow.pop %v273
    %v275 = vsel %vm268, %v274, 0.0
    %276 = vadd.xlane.f32.xlu0 %v275
    %v277 = vpop.xlane.xlu0 %276
    %v278 = vrcp.pop %v277
    %v279 = vmul.f32 %v274, %v278
    %v281 = vrot.slane %v279, 1
    %v283 = vpack.c.bf16 %v279, %v279
    %v284 = vpack.c.bf16 %v281, %v281
    %vm285 = vcmask 64512
    %v287 = vsel %vm285, %v283, 0
    %vm289 = vcmask 1043456
    %v290 = vsel %vm289, %v195, 0
    %292 = vmatpush.bf16.msra.mxu0 0
    %293 = vmatpush.bf16.msra.mxu0 0
    %294 = vmatpush.bf16.msra.mxu0 0
    %295 = vmatpush.bf16.msra.mxu0 0
    %296 = vmatpush.bf16.msra.mxu0 0
    %297 = vmatpush.bf16.msra.mxu0 0
    %298 = vmatpush.bf16.msra.mxu0 0
    %299 = vmatpush.bf16.msra.mxu0 %v290
    %300 = vmatmul.bf16.gmra.mxu0 %v287
    %v301 = vpop.f32.mrf.mxu0
    %v302 = vadd.f32 0.0, %v301
    %v303 = vpop.f32.mrf.mxu0
    %304 = vdwg.mxu0
    %v306 = vsel %vm285, %v284, 0
    %v308 = vsel %vm289, %v196, 0
    %310 = vmatpush.bf16.msra.mxu0 0
    %311 = vmatpush.bf16.msra.mxu0 0
    %312 = vmatpush.bf16.msra.mxu0 0
    %313 = vmatpush.bf16.msra.mxu0 0
    %314 = vmatpush.bf16.msra.mxu0 0
    %315 = vmatpush.bf16.msra.mxu0 0
    %316 = vmatpush.bf16.msra.mxu0 0
    %317 = vmatpush.bf16.msra.mxu0 %v308
    %318 = vmatmul.bf16.gmra.mxu0 %v306
    %v319 = vpop.f32.mrf.mxu0
    %v320 = vadd.f32 0.0, %v319
    %v321 = vpop.f32.mrf.mxu0
    %322 = vdwg.mxu0
    %v323 = vpack.c.bf16 %v302, %v302
    %v324 = vpack.c.bf16 %v320, %v320
    %v325 = vld [vmem:[#allocation10] sm:$0xf]
    %v326 = vld [vmem:[#allocation10 + $0x4] sm:$0xf]
    %v327 = vld [vmem:[#allocation10 + $0x8] sm:$0xf]
    %v328 = vld [vmem:[#allocation10 + $0xc] sm:$0xf]
    %v329 = vld [vmem:[%s7] sm:$0x1]
    %v331 = vperm.slane %v329, 0
    %v335 = vunpack.c.l.b16 %v323
    %v336 = vunpack.c.l.b16 %v324
    %v337 = vrot.slane %v336, 7
    %v338 = vsel %vm264, %v337, %v335
    %v339 = vpack.c.b16 %v338, %v338
    %v344 = vunpack.c.l.b16 %v325
    %v345 = vunpack.c.l.b16 %v326
    %v346 = vunpack.c.l.b16 %v327
    %v347 = vunpack.c.l.b16 %v328
    %v348 = vpack.c.b16 %v345, %v344
    %v349 = vpack.c.b16 %v347, %v346
    %v353 = vsel %vm211, %v339, 0
    %355 = vmatpush.bf16.msra.mxu0 0
    %356 = vmatpush.bf16.msra.mxu0 0
    %357 = vmatpush.bf16.msra.mxu0 0
    %358 = vmatpush.bf16.msra.mxu0 0
    %359 = vmatpush.bf16.msra.mxu0 0
    %360 = vmatpush.bf16.msra.mxu0 0
    %361 = vmatpush.bf16.msra.mxu0 %v349
    %362 = vmatpush.bf16.msra.mxu0 %v348
    %363 = vmatmul.bf16.gmra.mxu0 %v353
    %v364 = vpop.f32.mrf.mxu0
    %v365 = vadd.f32 %v331, %v364
    %v366 = vpop.f32.mrf.mxu0
    %367 = vdwg.mxu0
    %v368 = vld [vmem:[#allocation2] sm:$0xf]
    %v369 = vld [vmem:[#allocation2 + $0x4] sm:$0xf]
    %v370 = vld [vmem:[#allocation8] sm:$0xf]
    %v371 = vld [vmem:[#allocation8 + $0x4] sm:$0xf]
    %v374 = vunpack.c.l.b16 %v368
    %v375 = vunpack.c.l.b16 %v369
    %v376 = vpack.c.b16 %v375, %v374
    %v379 = vunpack.c.l.b16 %v370
    %v380 = vunpack.c.l.b16 %v371
    %v381 = vpack.c.b16 %v380, %v379
    %vm383 = vcmask 130048
    %v385 = vsel %vm383, %v376, 0
    %387 = vmatpush.bf16.msra.mxu0 0
    %388 = vmatpush.bf16.msra.mxu0 0
    %389 = vmatpush.bf16.msra.mxu0 0
    %390 = vmatpush.bf16.msra.mxu0 0
    %391 = vmatpush.bf16.msra.mxu0 0
    %392 = vmatpush.bf16.msra.mxu0 0
    %393 = vmatpush.bf16.msra.mxu0 0
    %394 = vmatpush.bf16.msra.mxu0 %v381
    %395 = vmatmul.bf16.gmra.mxu0 %v385
    %v396 = vpop.f32.mrf.mxu0
    %v397 = vadd.f32 0.0, %v396
    %v398 = vpop.f32.mrf.mxu0
    %v399 = vadd.f32 0.0, %v398
    %400 = vdwg.mxu0
    %v401 = vld [vmem:[%s8] sm:$0x1]
    %v403 = vperm.slane %v401, 0
    %v404 = vld [vmem:[%s11] sm:$0x1]
    %v406 = vperm.slane %v404, 0
    %v408 = vld [vmem:[%s12] sm:$0x1]
    %v410 = vperm.slane %v408, 0
    %v411 = vld [vmem:[#allocation7] sm:$0x3]
    %v412 = vld [vmem:[%s197] sm:$0x3]
    %v413 = vpack.c.bf16 %v411, %v411
    %v414 = vld [vmem:[#allocation11] sm:$0xf]
    %v415 = vld [vmem:[#allocation11 + $0x4] sm:$0xf]
    %v416 = vld [vmem:[#allocation11 + $0x8] sm:$0xf]
    %v417 = vld [vmem:[#allocation11 + $0xc] sm:$0xf]
    %v422 = vunpack.c.l.b16 %v414
    %v423 = vunpack.c.l.b16 %v415
    %v424 = vunpack.c.l.b16 %v416
    %v425 = vunpack.c.l.b16 %v417
    %v426 = vpack.c.b16 %v423, %v422
    %v427 = vpack.c.b16 %v425, %v424
    %v431 = vsel %vm211, %v413, 0
    %433 = vmatpush.bf16.msra.mxu0 0
    %434 = vmatpush.bf16.msra.mxu0 0
    %435 = vmatpush.bf16.msra.mxu0 0
    %436 = vmatpush.bf16.msra.mxu0 0
    %437 = vmatpush.bf16.msra.mxu0 0
    %438 = vmatpush.bf16.msra.mxu0 0
    %439 = vmatpush.bf16.msra.mxu0 %v427
    %440 = vmatpush.bf16.msra.mxu0 %v426
    %441 = vmatmul.bf16.gmra.mxu0 %v431
    %v442 = vpop.f32.mrf.mxu0
    %v443 = vadd.f32 0.0, %v442
    %v444 = vpop.f32.mrf.mxu0
    %445 = vdwg.mxu0
    %v446 = vpack.c.bf16 %v412, %v412
    %v447 = vld [vmem:[#allocation14] sm:$0xf]
    %v448 = vld [vmem:[#allocation14 + $0x4] sm:$0xf]
    %v449 = vld [vmem:[#allocation14 + $0x8] sm:$0xf]
    %v450 = vld [vmem:[#allocation14 + $0xc] sm:$0xf]
    %v455 = vunpack.c.l.b16 %v447
    %v456 = vunpack.c.l.b16 %v448
    %v457 = vunpack.c.l.b16 %v449
    %v458 = vunpack.c.l.b16 %v450
    %v459 = vpack.c.b16 %v456, %v455
    %v460 = vpack.c.b16 %v458, %v457
    %v464 = vsel %vm211, %v446, 0
    %466 = vmatpush.bf16.msra.mxu0 0
    %467 = vmatpush.bf16.msra.mxu0 0
    %468 = vmatpush.bf16.msra.mxu0 0
    %469 = vmatpush.bf16.msra.mxu0 0
    %470 = vmatpush.bf16.msra.mxu0 0
    %471 = vmatpush.bf16.msra.mxu0 0
    %472 = vmatpush.bf16.msra.mxu0 %v460
    %473 = vmatpush.bf16.msra.mxu0 %v459
    %474 = vmatmul.bf16.gmra.mxu0 %v464
    %v475 = vpop.f32.mrf.mxu0
    %v476 = vadd.f32 0.0, %v475
    %v477 = vpop.f32.mrf.mxu0
    %478 = vdwg.mxu0
    %v479 = vadd.f32 %v397, %v365
    %v480 = vadd.f32 %v479, %v443
    %v481 = vxor.u32 %v480, 2147483648
    %v482 = vmul.f32 %v481, 1.442695
    %v483 = vpow.pop %v482
    %v484 = vadd.f32 %v483, 1.0
    %v485 = vrcp.pop %v484
    %v486 = vmul.f32 %v484, %v485
    %v487 = vsub.f32 1.0, %v486
    %v488 = vmul.f32 %v485, %v487
    %v489 = vadd.f32 %v485, %v488
    %vm490 = vweird.f32 %v484
    %vm491 = vweird.f32 %v485
    %vm492 = vmor %vm490, %vm491
    %v493 = vsel %vm492, %v485, %v489
    %v494 = vand.u32 2147483647, %v484
    %vm495 = vcmp.eq.f32.partialorder %v494, 8.507059e+37
    %v496 = vand.u32 %v484, 2147483648
    %v497 = vor.u32 1.1754944e-38, %v496
    %v498 = vsel %vm495, %v497, %v493
    %v499 = vmul.f32 1.0, %v498
    %500 = vrot.lane.b32.xlu0 %v403, 64
    %v501 = vpop.permute.xlu0 %500
    %v503 = vadd.f32 %v443, %v501
    %505 = vrot.lane.b32.xlu0 %v503, 64
    %v506 = vpop.permute.xlu0 %505
    %v508 = vmul.f32 %v499, %v506
    %510 = vrot.lane.b32.xlu0 %v508, 64
    %v511 = vpop.permute.xlu0 %510
    %v513 = vadd.f32 %v479, %v511
    %v514 = vtanh.pop %v513
    %v515 = vsub.f32 1.0, %v499
    %517 = vrot.lane.b32.xlu0 %v514, 96
    %v518 = vpop.permute.xlu0 %517
    %v520 = vmul.f32 %v515, %v518
    %522 = vrot.lane.b32.xlu0 %v411, 32
    %v523 = vpop.permute.xlu0 %522
    %v525 = vmul.f32 %v499, %v523
    %v526 = vadd.f32 %v520, %v525
    %v527 = vpack.c.bf16 %v526, %v526
    %v528 = vld [vmem:[#allocation13] sm:$0xf]
    %v529 = vld [vmem:[#allocation13 + $0x4] sm:$0xf]
    %v530 = vld [vmem:[#allocation13 + $0x8] sm:$0xf]
    %v531 = vld [vmem:[#allocation13 + $0xc] sm:$0xf]
    %533 = vrot.lane.b32.xlu0 %v527, 96
    %v534 = vpop.permute.xlu0 %533
    %v539 = vunpack.c.l.b16 %v528
    %v540 = vunpack.c.l.b16 %v529
    %v541 = vunpack.c.l.b16 %v530
    %v542 = vunpack.c.l.b16 %v531
    %v543 = vpack.c.b16 %v540, %v539
    %v544 = vpack.c.b16 %v542, %v541
    %v548 = vsel %vm211, %v534, 0
    %550 = vmatpush.bf16.msra.mxu0 0
    %551 = vmatpush.bf16.msra.mxu0 0
    %552 = vmatpush.bf16.msra.mxu0 0
    %553 = vmatpush.bf16.msra.mxu0 0
    %554 = vmatpush.bf16.msra.mxu0 0
    %555 = vmatpush.bf16.msra.mxu0 0
    %556 = vmatpush.bf16.msra.mxu0 %v544
    %557 = vmatpush.bf16.msra.mxu0 %v543
    %558 = vmatmul.bf16.gmra.mxu0 %v548
    %v559 = vpop.f32.mrf.mxu0
    %v560 = vadd.f32 %v406, %v559
    %v561 = vpop.f32.mrf.mxu0
    %562 = vdwg.mxu0
    %v563 = vadd.f32 %v560, %v476
    %v564 = vxor.u32 %v563, 2147483648
    %v565 = vmul.f32 %v564, 1.442695
    %v566 = vpow.pop %v565
    %v567 = vadd.f32 %v566, 1.0
    %v568 = vrcp.pop %v567
    %v569 = vmul.f32 %v567, %v568
    %v570 = vsub.f32 1.0, %v569
    %v571 = vmul.f32 %v568, %v570
    %v572 = vadd.f32 %v568, %v571
    %vm573 = vweird.f32 %v567
    %vm574 = vweird.f32 %v568
    %vm575 = vmor %vm573, %vm574
    %v576 = vsel %vm575, %v568, %v572
    %v577 = vand.u32 2147483647, %v567
    %vm578 = vcmp.eq.f32.partialorder %v577, 8.507059e+37
    %v579 = vand.u32 %v567, 2147483648
    %v580 = vor.u32 1.1754944e-38, %v579
    %v581 = vsel %vm578, %v580, %v576
    %v582 = vmul.f32 1.0, %v581
    %583 = vrot.lane.b32.xlu0 %v410, 64
    %v584 = vpop.permute.xlu0 %583
    %v586 = vadd.f32 %v476, %v584
    %588 = vrot.lane.b32.xlu0 %v586, 64
    %v589 = vpop.permute.xlu0 %588
    %v591 = vmul.f32 %v582, %v589
    %593 = vrot.lane.b32.xlu0 %v591, 64
    %v594 = vpop.permute.xlu0 %593
    %v596 = vadd.f32 %v560, %v594
    %v597 = vtanh.pop %v596
    %v598 = vsub.f32 1.0, %v582
    %600 = vrot.lane.b32.xlu0 %v597, 96
    %v601 = vpop.permute.xlu0 %600
    %v603 = vmul.f32 %v598, %v601
    %605 = vrot.lane.b32.xlu0 %v412, 32
    %v606 = vpop.permute.xlu0 %605
    %v608 = vmul.f32 %v582, %v606
    %v609 = vadd.f32 %v603, %v608
    %610 = vmatpush.bf16.msra.mxu0 0
    %611 = vmatpush.bf16.msra.mxu0 0
    %612 = vmatpush.bf16.msra.mxu0 0
    %613 = vmatpush.bf16.msra.mxu0 0
    %614 = vmatpush.bf16.msra.mxu0 0
    %615 = vmatpush.bf16.msra.mxu0 0
    %616 = vmatpush.bf16.msra.mxu0 %v427
    %617 = vmatpush.bf16.msra.mxu0 %v426
    %618 = vmatmul.bf16.gmra.mxu0 %v548
    %v619 = vpop.f32.mrf.mxu0
    %v620 = vadd.f32 0.0, %v619
    %v621 = vpop.f32.mrf.mxu0
    %622 = vdwg.mxu0
    %v623 = vpack.c.bf16 %v609, %v609
    %625 = vrot.lane.b32.xlu0 %v623, 96
    %v626 = vpop.permute.xlu0 %625
    %v628 = vsel %vm211, %v626, 0
    %630 = vmatpush.bf16.msra.mxu0 0
    %631 = vmatpush.bf16.msra.mxu0 0
    %632 = vmatpush.bf16.msra.mxu0 0
    %633 = vmatpush.bf16.msra.mxu0 0
    %634 = vmatpush.bf16.msra.mxu0 0
    %635 = vmatpush.bf16.msra.mxu0 0
    %636 = vmatpush.bf16.msra.mxu0 %v460
    %637 = vmatpush.bf16.msra.mxu0 %v459
    %638 = vmatmul.bf16.gmra.mxu0 %v628
    %v639 = vpop.f32.mrf.mxu0
    %v640 = vadd.f32 0.0, %v639
    %v641 = vpop.f32.mrf.mxu0
    %642 = vdwg.mxu0
    %v644 = vrot.slane %v365, 6
    %v646 = vadd.f32 %v397, %v644
    %v648 = vrot.slane %v620, 6
    %v650 = vadd.f32 %v646, %v648
    %v651 = vxor.u32 %v650, 2147483648
    %v652 = vmul.f32 %v651, 1.442695
    %v653 = vpow.pop %v652
    %v654 = vadd.f32 %v653, 1.0
    %v655 = vrcp.pop %v654
    %v656 = vmul.f32 %v654, %v655
    %v657 = vsub.f32 1.0, %v656
    %v658 = vmul.f32 %v655, %v657
    %v659 = vadd.f32 %v655, %v658
    %vm660 = vweird.f32 %v654
    %vm661 = vweird.f32 %v655
    %vm662 = vmor %vm660, %vm661
    %v663 = vsel %vm662, %v655, %v659
    %v664 = vand.u32 2147483647, %v654
    %vm665 = vcmp.eq.f32.partialorder %v664, 8.507059e+37
    %v666 = vand.u32 %v654, 2147483648
    %v667 = vor.u32 1.1754944e-38, %v666
    %v668 = vsel %vm665, %v667, %v663
    %v669 = vmul.f32 1.0, %v668
    %v670 = vadd.f32 %v620, %v501
    %v672 = vrot.slane %v670, 6
    %673 = vrot.lane.b32.xlu0 %v672, 64
    %v674 = vpop.permute.xlu0 %673
    %v676 = vmul.f32 %v669, %v674
    %678 = vrot.lane.b32.xlu0 %v676, 64
    %v679 = vpop.permute.xlu0 %678
    %v681 = vadd.f32 %v646, %v679
    %v682 = vtanh.pop %v681
    %v683 = vsub.f32 1.0, %v669
    %685 = vrot.lane.b32.xlu0 %v682, 96
    %v686 = vpop.permute.xlu0 %685
    %v688 = vmul.f32 %v683, %v686
    %v690 = vrot.slane %v526, 6
    %v692 = vmul.f32 %v669, %v690
    %v693 = vadd.f32 %v688, %v692
    %v694 = vpack.c.bf16 %v693, %v693
    %v696 = vrot.slane %v694, 1
    %697 = vrot.lane.b32.xlu0 %v696, 96
    %v698 = vpop.permute.xlu0 %697
    %v700 = vsel %vm211, %v698, 0
    %702 = vmatpush.bf16.msra.mxu0 0
    %703 = vmatpush.bf16.msra.mxu0 0
    %704 = vmatpush.bf16.msra.mxu0 0
    %705 = vmatpush.bf16.msra.mxu0 0
    %706 = vmatpush.bf16.msra.mxu0 0
    %707 = vmatpush.bf16.msra.mxu0 0
    %708 = vmatpush.bf16.msra.mxu0 %v544
    %709 = vmatpush.bf16.msra.mxu0 %v543
    %710 = vmatmul.bf16.gmra.mxu0 %v700
    %v711 = vpop.f32.mrf.mxu0
    %v712 = vadd.f32 %v406, %v711
    %v713 = vpop.f32.mrf.mxu0
    %714 = vdwg.mxu0
    %v715 = vadd.f32 %v712, %v640
    %v716 = vxor.u32 %v715, 2147483648
    %v717 = vmul.f32 %v716, 1.442695
    %v718 = vpow.pop %v717
    %v719 = vadd.f32 %v718, 1.0
    %v720 = vrcp.pop %v719
    %v721 = vmul.f32 %v719, %v720
    %v722 = vsub.f32 1.0, %v721
    %v723 = vmul.f32 %v720, %v722
    %v724 = vadd.f32 %v720, %v723
    %vm725 = vweird.f32 %v719
    %vm726 = vweird.f32 %v720
    %vm727 = vmor %vm725, %vm726
    %v728 = vsel %vm727, %v720, %v724
    %v729 = vand.u32 2147483647, %v719
    %vm730 = vcmp.eq.f32.partialorder %v729, 8.507059e+37
    %v731 = vand.u32 %v719, 2147483648
    %v732 = vor.u32 1.1754944e-38, %v731
    %v733 = vsel %vm730, %v732, %v728
    %v734 = vmul.f32 1.0, %v733
    %v735 = vadd.f32 %v640, %v584
    %737 = vrot.lane.b32.xlu0 %v735, 64
    %v738 = vpop.permute.xlu0 %737
    %v740 = vmul.f32 %v734, %v738
    %742 = vrot.lane.b32.xlu0 %v740, 64
    %v743 = vpop.permute.xlu0 %742
    %v745 = vadd.f32 %v712, %v743
    %v746 = vtanh.pop %v745
    %v747 = vsub.f32 1.0, %v734
    %749 = vrot.lane.b32.xlu0 %v746, 96
    %v750 = vpop.permute.xlu0 %749
    %v752 = vmul.f32 %v747, %v750
    %v753 = vmul.f32 %v734, %v609
    %v754 = vadd.f32 %v752, %v753
    %755 = vmatpush.bf16.msra.mxu0 0
    %756 = vmatpush.bf16.msra.mxu0 0
    %757 = vmatpush.bf16.msra.mxu0 0
    %758 = vmatpush.bf16.msra.mxu0 0
    %759 = vmatpush.bf16.msra.mxu0 0
    %760 = vmatpush.bf16.msra.mxu0 0
    %761 = vmatpush.bf16.msra.mxu0 %v427
    %762 = vmatpush.bf16.msra.mxu0 %v426
    %763 = vmatmul.bf16.gmra.mxu0 %v700
    %v764 = vpop.f32.mrf.mxu0
    %v765 = vadd.f32 0.0, %v764
    %v766 = vpop.f32.mrf.mxu0
    %767 = vdwg.mxu0
    %v768 = vpack.c.bf16 %v754, %v754
    %770 = vrot.lane.b32.xlu0 %v768, 96
    %v771 = vpop.permute.xlu0 %770
    %v773 = vsel %vm211, %v771, 0
    %775 = vmatpush.bf16.msra.mxu0 0
    %776 = vmatpush.bf16.msra.mxu0 0
    %777 = vmatpush.bf16.msra.mxu0 0
    %778 = vmatpush.bf16.msra.mxu0 0
    %779 = vmatpush.bf16.msra.mxu0 0
    %780 = vmatpush.bf16.msra.mxu0 0
    %781 = vmatpush.bf16.msra.mxu0 %v460
    %782 = vmatpush.bf16.msra.mxu0 %v459
    %783 = vmatmul.bf16.gmra.mxu0 %v773
    %v784 = vpop.f32.mrf.mxu0
    %v785 = vadd.f32 0.0, %v784
    %v786 = vpop.f32.mrf.mxu0
    %787 = vdwg.mxu0
    %v788 = vrot.slane %v365, 4
    %v790 = vadd.f32 %v397, %v788
    %v792 = vrot.slane %v765, 4
    %v794 = vadd.f32 %v790, %v792
    %v795 = vxor.u32 %v794, 2147483648
    %v796 = vmul.f32 %v795, 1.442695
    %v797 = vpow.pop %v796
    %v798 = vadd.f32 %v797, 1.0
    %v799 = vrcp.pop %v798
    %v800 = vmul.f32 %v798, %v799
    %v801 = vsub.f32 1.0, %v800
    %v802 = vmul.f32 %v799, %v801
    %v803 = vadd.f32 %v799, %v802
    %vm804 = vweird.f32 %v798
    %vm805 = vweird.f32 %v799
    %vm806 = vmor %vm804, %vm805
    %v807 = vsel %vm806, %v799, %v803
    %v808 = vand.u32 2147483647, %v798
    %vm809 = vcmp.eq.f32.partialorder %v808, 8.507059e+37
    %v810 = vand.u32 %v798, 2147483648
    %v811 = vor.u32 1.1754944e-38, %v810
    %v812 = vsel %vm809, %v811, %v807
    %v813 = vmul.f32 1.0, %v812
    %v814 = vadd.f32 %v765, %v501
    %v816 = vrot.slane %v814, 4
    %817 = vrot.lane.b32.xlu0 %v816, 64
    %v818 = vpop.permute.xlu0 %817
    %v820 = vmul.f32 %v813, %v818
    %822 = vrot.lane.b32.xlu0 %v820, 64
    %v823 = vpop.permute.xlu0 %822
    %v825 = vadd.f32 %v790, %v823
    %v826 = vtanh.pop %v825
    %v827 = vsub.f32 1.0, %v813
    %829 = vrot.lane.b32.xlu0 %v826, 96
    %v830 = vpop.permute.xlu0 %829
    %v832 = vmul.f32 %v827, %v830
    %v834 = vrot.slane %v693, 6
    %v836 = vmul.f32 %v813, %v834
    %v837 = vadd.f32 %v832, %v836
    %v838 = vpack.c.bf16 %v837, %v837
    %v840 = vrot.slane %v838, 2
    %841 = vrot.lane.b32.xlu0 %v840, 96
    %v842 = vpop.permute.xlu0 %841
    %v844 = vsel %vm211, %v842, 0
    %846 = vmatpush.bf16.msra.mxu0 0
    %847 = vmatpush.bf16.msra.mxu0 0
    %848 = vmatpush.bf16.msra.mxu0 0
    %849 = vmatpush.bf16.msra.mxu0 0
    %850 = vmatpush.bf16.msra.mxu0 0
    %851 = vmatpush.bf16.msra.mxu0 0
    %852 = vmatpush.bf16.msra.mxu0 %v544
    %853 = vmatpush.bf16.msra.mxu0 %v543
    %854 = vmatmul.bf16.gmra.mxu0 %v844
    %v855 = vpop.f32.mrf.mxu0
    %v856 = vadd.f32 %v406, %v855
    %v857 = vpop.f32.mrf.mxu0
    %858 = vdwg.mxu0
    %v859 = vadd.f32 %v856, %v785
    %v860 = vxor.u32 %v859, 2147483648
    %v861 = vmul.f32 %v860, 1.442695
    %v862 = vpow.pop %v861
    %v863 = vadd.f32 %v862, 1.0
    %v864 = vrcp.pop %v863
    %v865 = vmul.f32 %v863, %v864
    %v866 = vsub.f32 1.0, %v865
    %v867 = vmul.f32 %v864, %v866
    %v868 = vadd.f32 %v864, %v867
    %vm869 = vweird.f32 %v863
    %vm870 = vweird.f32 %v864
    %vm871 = vmor %vm869, %vm870
    %v872 = vsel %vm871, %v864, %v868
    %v873 = vand.u32 2147483647, %v863
    %vm874 = vcmp.eq.f32.partialorder %v873, 8.507059e+37
    %v875 = vand.u32 %v863, 2147483648
    %v876 = vor.u32 1.1754944e-38, %v875
    %v877 = vsel %vm874, %v876, %v872
    %v878 = vmul.f32 1.0, %v877
    %v879 = vadd.f32 %v785, %v584
    %881 = vrot.lane.b32.xlu0 %v879, 64
    %v882 = vpop.permute.xlu0 %881
    %v884 = vmul.f32 %v878, %v882
    %886 = vrot.lane.b32.xlu0 %v884, 64
    %v887 = vpop.permute.xlu0 %886
    %v889 = vadd.f32 %v856, %v887
    %v890 = vtanh.pop %v889
    %v891 = vsub.f32 1.0, %v878
    %893 = vrot.lane.b32.xlu0 %v890, 96
    %v894 = vpop.permute.xlu0 %893
    %v896 = vmul.f32 %v891, %v894
    %v897 = vmul.f32 %v878, %v754
    %v898 = vadd.f32 %v896, %v897
    %899 = vmatpush.bf16.msra.mxu0 0
    %900 = vmatpush.bf16.msra.mxu0 0
    %901 = vmatpush.bf16.msra.mxu0 0
    %902 = vmatpush.bf16.msra.mxu0 0
    %903 = vmatpush.bf16.msra.mxu0 0
    %904 = vmatpush.bf16.msra.mxu0 0
    %905 = vmatpush.bf16.msra.mxu0 %v427
    %906 = vmatpush.bf16.msra.mxu0 %v426
    %907 = vmatmul.bf16.gmra.mxu0 %v844
    %v908 = vpop.f32.mrf.mxu0
    %v909 = vadd.f32 0.0, %v908
    %v910 = vpop.f32.mrf.mxu0
    %911 = vdwg.mxu0
    %v912 = vpack.c.bf16 %v898, %v898
    %914 = vrot.lane.b32.xlu0 %v912, 96
    %v915 = vpop.permute.xlu0 %914
    %v917 = vsel %vm211, %v915, 0
    %919 = vmatpush.bf16.msra.mxu0 0
    %920 = vmatpush.bf16.msra.mxu0 0
    %921 = vmatpush.bf16.msra.mxu0 0
    %922 = vmatpush.bf16.msra.mxu0 0
    %923 = vmatpush.bf16.msra.mxu0 0
    %924 = vmatpush.bf16.msra.mxu0 0
    %925 = vmatpush.bf16.msra.mxu0 %v460
    %926 = vmatpush.bf16.msra.mxu0 %v459
    %927 = vmatmul.bf16.gmra.mxu0 %v917
    %v928 = vpop.f32.mrf.mxu0
    %v929 = vadd.f32 0.0, %v928
    %v930 = vpop.f32.mrf.mxu0
    %931 = vdwg.mxu0
    %v932 = vrot.slane %v365, 2
    %v934 = vadd.f32 %v397, %v932
    %v936 = vrot.slane %v909, 2
    %v938 = vadd.f32 %v934, %v936
    %v939 = vxor.u32 %v938, 2147483648
    %v940 = vmul.f32 %v939, 1.442695
    %v941 = vpow.pop %v940
    %v942 = vadd.f32 %v941, 1.0
    %v943 = vrcp.pop %v942
    %v944 = vmul.f32 %v942, %v943
    %v945 = vsub.f32 1.0, %v944
    %v946 = vmul.f32 %v943, %v945
    %v947 = vadd.f32 %v943, %v946
    %vm948 = vweird.f32 %v942
    %vm949 = vweird.f32 %v943
    %vm950 = vmor %vm948, %vm949
    %v951 = vsel %vm950, %v943, %v947
    %v952 = vand.u32 2147483647, %v942
    %vm953 = vcmp.eq.f32.partialorder %v952, 8.507059e+37
    %v954 = vand.u32 %v942, 2147483648
    %v955 = vor.u32 1.1754944e-38, %v954
    %v956 = vsel %vm953, %v955, %v951
    %v957 = vmul.f32 1.0, %v956
    %v958 = vadd.f32 %v909, %v501
    %v960 = vrot.slane %v958, 2
    %961 = vrot.lane.b32.xlu0 %v960, 64
    %v962 = vpop.permute.xlu0 %961
    %v964 = vmul.f32 %v957, %v962
    %966 = vrot.lane.b32.xlu0 %v964, 64
    %v967 = vpop.permute.xlu0 %966
    %v969 = vadd.f32 %v934, %v967
    %v970 = vtanh.pop %v969
    %v971 = vsub.f32 1.0, %v957
    %973 = vrot.lane.b32.xlu0 %v970, 96
    %v974 = vpop.permute.xlu0 %973
    %v976 = vmul.f32 %v971, %v974
    %v978 = vrot.slane %v837, 6
    %v980 = vmul.f32 %v957, %v978
    %v981 = vadd.f32 %v976, %v980
    %v982 = vpack.c.bf16 %v981, %v981
    %v984 = vrot.slane %v982, 3
    %985 = vrot.lane.b32.xlu0 %v984, 96
    %v986 = vpop.permute.xlu0 %985
    %v988 = vsel %vm211, %v986, 0
    %990 = vmatpush.bf16.msra.mxu0 0
    %991 = vmatpush.bf16.msra.mxu0 0
    %992 = vmatpush.bf16.msra.mxu0 0
    %993 = vmatpush.bf16.msra.mxu0 0
    %994 = vmatpush.bf16.msra.mxu0 0
    %995 = vmatpush.bf16.msra.mxu0 0
    %996 = vmatpush.bf16.msra.mxu0 %v544
    %997 = vmatpush.bf16.msra.mxu0 %v543
    %998 = vmatmul.bf16.gmra.mxu0 %v988
    %v999 = vpop.f32.mrf.mxu0
    %v1000 = vadd.f32 %v406, %v999
    %v1001 = vpop.f32.mrf.mxu0
    %1002 = vdwg.mxu0
    %v1003 = vadd.f32 %v1000, %v929
    %v1004 = vxor.u32 %v1003, 2147483648
    %v1005 = vmul.f32 %v1004, 1.442695
    %v1006 = vpow.pop %v1005
    %v1007 = vadd.f32 %v1006, 1.0
    %v1008 = vrcp.pop %v1007
    %v1009 = vmul.f32 %v1007, %v1008
    %v1010 = vsub.f32 1.0, %v1009
    %v1011 = vmul.f32 %v1008, %v1010
    %v1012 = vadd.f32 %v1008, %v1011
    %vm1013 = vweird.f32 %v1007
    %vm1014 = vweird.f32 %v1008
    %vm1015 = vmor %vm1013, %vm1014
    %v1016 = vsel %vm1015, %v1008, %v1012
    %v1017 = vand.u32 2147483647, %v1007
    %vm1018 = vcmp.eq.f32.partialorder %v1017, 8.507059e+37
    %v1019 = vand.u32 %v1007, 2147483648
    %v1020 = vor.u32 1.1754944e-38, %v1019
    %v1021 = vsel %vm1018, %v1020, %v1016
    %v1022 = vmul.f32 1.0, %v1021
    %v1023 = vadd.f32 %v929, %v584
    %1025 = vrot.lane.b32.xlu0 %v1023, 64
    %v1026 = vpop.permute.xlu0 %1025
    %v1028 = vmul.f32 %v1022, %v1026
    %1030 = vrot.lane.b32.xlu0 %v1028, 64
    %v1031 = vpop.permute.xlu0 %1030
    %v1033 = vadd.f32 %v1000, %v1031
    %v1034 = vtanh.pop %v1033
    %v1035 = vsub.f32 1.0, %v1022
    %1037 = vrot.lane.b32.xlu0 %v1034, 96
    %v1038 = vpop.permute.xlu0 %1037
    %v1040 = vmul.f32 %v1035, %v1038
    %v1041 = vmul.f32 %v1022, %v898
    %v1042 = vadd.f32 %v1040, %v1041
    %1043 = vmatpush.bf16.msra.mxu0 0
    %1044 = vmatpush.bf16.msra.mxu0 0
    %1045 = vmatpush.bf16.msra.mxu0 0
    %1046 = vmatpush.bf16.msra.mxu0 0
    %1047 = vmatpush.bf16.msra.mxu0 0
    %1048 = vmatpush.bf16.msra.mxu0 0
    %1049 = vmatpush.bf16.msra.mxu0 %v427
    %1050 = vmatpush.bf16.msra.mxu0 %v426
    %1051 = vmatmul.bf16.gmra.mxu0 %v988
    %v1052 = vpop.f32.mrf.mxu0
    %v1053 = vadd.f32 0.0, %v1052
    %v1054 = vpop.f32.mrf.mxu0
    %1055 = vdwg.mxu0
    %v1056 = vpack.c.bf16 %v1042, %v1042
    %1058 = vrot.lane.b32.xlu0 %v1056, 96
    %v1059 = vpop.permute.xlu0 %1058
    %v1061 = vsel %vm211, %v1059, 0
    %1063 = vmatpush.bf16.msra.mxu0 0
    %1064 = vmatpush.bf16.msra.mxu0 0
    %1065 = vmatpush.bf16.msra.mxu0 0
    %1066 = vmatpush.bf16.msra.mxu0 0
    %1067 = vmatpush.bf16.msra.mxu0 0
    %1068 = vmatpush.bf16.msra.mxu0 0
    %1069 = vmatpush.bf16.msra.mxu0 %v460
    %1070 = vmatpush.bf16.msra.mxu0 %v459
    %1071 = vmatmul.bf16.gmra.mxu0 %v1061
    %v1072 = vpop.f32.mrf.mxu0
    %v1073 = vadd.f32 0.0, %v1072
    %v1074 = vpop.f32.mrf.mxu0
    %1075 = vdwg.mxu0
    %v1076 = vadd.f32 %v399, %v365
    %v1077 = vadd.f32 %v1076, %v1053
    %v1078 = vxor.u32 %v1077, 2147483648
    %v1079 = vmul.f32 %v1078, 1.442695
    %v1080 = vpow.pop %v1079
    %v1081 = vadd.f32 %v1080, 1.0
    %v1082 = vrcp.pop %v1081
    %v1083 = vmul.f32 %v1081, %v1082
    %v1084 = vsub.f32 1.0, %v1083
    %v1085 = vmul.f32 %v1082, %v1084
    %v1086 = vadd.f32 %v1082, %v1085
    %vm1087 = vweird.f32 %v1081
    %vm1088 = vweird.f32 %v1082
    %vm1089 = vmor %vm1087, %vm1088
    %v1090 = vsel %vm1089, %v1082, %v1086
    %v1091 = vand.u32 2147483647, %v1081
    %vm1092 = vcmp.eq.f32.partialorder %v1091, 8.507059e+37
    %v1093 = vand.u32 %v1081, 2147483648
    %v1094 = vor.u32 1.1754944e-38, %v1093
    %v1095 = vsel %vm1092, %v1094, %v1090
    %v1096 = vmul.f32 1.0, %v1095
    %v1097 = vadd.f32 %v1053, %v501
    %1099 = vrot.lane.b32.xlu0 %v1097, 64
    %v1100 = vpop.permute.xlu0 %1099
    %v1102 = vmul.f32 %v1096, %v1100
    %1104 = vrot.lane.b32.xlu0 %v1102, 64
    %v1105 = vpop.permute.xlu0 %1104
    %v1107 = vadd.f32 %v1076, %v1105
    %v1108 = vtanh.pop %v1107
    %v1109 = vsub.f32 1.0, %v1096
    %1111 = vrot.lane.b32.xlu0 %v1108, 96
    %v1112 = vpop.permute.xlu0 %1111
    %v1114 = vmul.f32 %v1109, %v1112
    %v1116 = vrot.slane %v981, 6
    %v1118 = vmul.f32 %v1096, %v1116
    %v1119 = vadd.f32 %v1114, %v1118
    %v1120 = vpack.c.bf16 %v1119, %v1119
    %1122 = vrot.lane.b32.xlu0 %v1120, 96
    %v1123 = vpop.permute.xlu0 %1122
    %v1125 = vsel %vm211, %v1123, 0
    %1127 = vmatpush.bf16.msra.mxu0 0
    %1128 = vmatpush.bf16.msra.mxu0 0
    %1129 = vmatpush.bf16.msra.mxu0 0
    %1130 = vmatpush.bf16.msra.mxu0 0
    %1131 = vmatpush.bf16.msra.mxu0 0
    %1132 = vmatpush.bf16.msra.mxu0 0
    %1133 = vmatpush.bf16.msra.mxu0 %v544
    %1134 = vmatpush.bf16.msra.mxu0 %v543
    %1135 = vmatmul.bf16.gmra.mxu0 %v1125
    %v1136 = vpop.f32.mrf.mxu0
    %v1137 = vadd.f32 %v406, %v1136
    %v1138 = vpop.f32.mrf.mxu0
    %1139 = vdwg.mxu0
    %v1140 = vadd.f32 %v1137, %v1073
    %v1141 = vxor.u32 %v1140, 2147483648
    %v1142 = vmul.f32 %v1141, 1.442695
    %v1143 = vpow.pop %v1142
    %v1144 = vadd.f32 %v1143, 1.0
    %v1145 = vrcp.pop %v1144
    %v1146 = vmul.f32 %v1144, %v1145
    %v1147 = vsub.f32 1.0, %v1146
    %v1148 = vmul.f32 %v1145, %v1147
    %v1149 = vadd.f32 %v1145, %v1148
    %vm1150 = vweird.f32 %v1144
    %vm1151 = vweird.f32 %v1145
    %vm1152 = vmor %vm1150, %vm1151
    %v1153 = vsel %vm1152, %v1145, %v1149
    %v1154 = vand.u32 2147483647, %v1144
    %vm1155 = vcmp.eq.f32.partialorder %v1154, 8.507059e+37
    %v1156 = vand.u32 %v1144, 2147483648
    %v1157 = vor.u32 1.1754944e-38, %v1156
    %v1158 = vsel %vm1155, %v1157, %v1153
    %v1159 = vmul.f32 1.0, %v1158
    %v1160 = vadd.f32 %v1073, %v584
    %1162 = vrot.lane.b32.xlu0 %v1160, 64
    %v1163 = vpop.permute.xlu0 %1162
    %v1165 = vmul.f32 %v1159, %v1163
    %1167 = vrot.lane.b32.xlu0 %v1165, 64
    %v1168 = vpop.permute.xlu0 %1167
    %v1170 = vadd.f32 %v1137, %v1168
    %v1171 = vtanh.pop %v1170
    %v1172 = vsub.f32 1.0, %v1159
    %1174 = vrot.lane.b32.xlu0 %v1171, 96
    %v1175 = vpop.permute.xlu0 %1174
    %v1177 = vmul.f32 %v1172, %v1175
    %v1178 = vmul.f32 %v1159, %v1042
    %v1179 = vadd.f32 %v1177, %v1178
    %1180 = vmatpush.bf16.msra.mxu0 0
    %1181 = vmatpush.bf16.msra.mxu0 0
    %1182 = vmatpush.bf16.msra.mxu0 0
    %1183 = vmatpush.bf16.msra.mxu0 0
    %1184 = vmatpush.bf16.msra.mxu0 0
    %1185 = vmatpush.bf16.msra.mxu0 0
    %1186 = vmatpush.bf16.msra.mxu0 %v427
    %1187 = vmatpush.bf16.msra.mxu0 %v426
    %1188 = vmatmul.bf16.gmra.mxu0 %v1125
    %v1189 = vpop.f32.mrf.mxu0
    %v1190 = vadd.f32 0.0, %v1189
    %v1191 = vpop.f32.mrf.mxu0
    %1192 = vdwg.mxu0
    %v1193 = vpack.c.bf16 %v1179, %v1179
    %1195 = vrot.lane.b32.xlu0 %v1193, 96
    %v1196 = vpop.permute.xlu0 %1195
    %v1198 = vsel %vm211, %v1196, 0
    %1200 = vmatpush.bf16.msra.mxu0 0
    %1201 = vmatpush.bf16.msra.mxu0 0
    %1202 = vmatpush.bf16.msra.mxu0 0
    %1203 = vmatpush.bf16.msra.mxu0 0
    %1204 = vmatpush.bf16.msra.mxu0 0
    %1205 = vmatpush.bf16.msra.mxu0 0
    %1206 = vmatpush.bf16.msra.mxu0 %v460
    %1207 = vmatpush.bf16.msra.mxu0 %v459
    %1208 = vmatmul.bf16.gmra.mxu0 %v1198
    %v1209 = vpop.f32.mrf.mxu0
    %v1210 = vadd.f32 0.0, %v1209
    %v1211 = vpop.f32.mrf.mxu0
    %1212 = vdwg.mxu0
    %v1213 = vadd.f32 %v399, %v644
    %v1215 = vrot.slane %v1190, 6
    %v1217 = vadd.f32 %v1213, %v1215
    %v1218 = vxor.u32 %v1217, 2147483648
    %v1219 = vmul.f32 %v1218, 1.442695
    %v1220 = vpow.pop %v1219
    %v1221 = vadd.f32 %v1220, 1.0
    %v1222 = vrcp.pop %v1221
    %v1223 = vmul.f32 %v1221, %v1222
    %v1224 = vsub.f32 1.0, %v1223
    %v1225 = vmul.f32 %v1222, %v1224
    %v1226 = vadd.f32 %v1222, %v1225
    %vm1227 = vweird.f32 %v1221
    %vm1228 = vweird.f32 %v1222
    %vm1229 = vmor %vm1227, %vm1228
    %v1230 = vsel %vm1229, %v1222, %v1226
    %v1231 = vand.u32 2147483647, %v1221
    %vm1232 = vcmp.eq.f32.partialorder %v1231, 8.507059e+37
    %v1233 = vand.u32 %v1221, 2147483648
    %v1234 = vor.u32 1.1754944e-38, %v1233
    %v1235 = vsel %vm1232, %v1234, %v1230
    %v1236 = vmul.f32 1.0, %v1235
    %v1237 = vadd.f32 %v1190, %v501
    %v1239 = vrot.slane %v1237, 6
    %1240 = vrot.lane.b32.xlu0 %v1239, 64
    %v1241 = vpop.permute.xlu0 %1240
    %v1243 = vmul.f32 %v1236, %v1241
    %1245 = vrot.lane.b32.xlu0 %v1243, 64
    %v1246 = vpop.permute.xlu0 %1245
    %v1248 = vadd.f32 %v1213, %v1246
    %v1249 = vtanh.pop %v1248
    %v1250 = vsub.f32 1.0, %v1236
    %1252 = vrot.lane.b32.xlu0 %v1249, 96
    %v1253 = vpop.permute.xlu0 %1252
    %v1255 = vmul.f32 %v1250, %v1253
    %v1257 = vrot.slane %v1119, 6
    %v1259 = vmul.f32 %v1236, %v1257
    %v1260 = vadd.f32 %v1255, %v1259
    %v1261 = vpack.c.bf16 %v1260, %v1260
    %v1263 = vrot.slane %v1261, 1
    %1264 = vrot.lane.b32.xlu0 %v1263, 96
    %v1265 = vpop.permute.xlu0 %1264
    %v1267 = vsel %vm211, %v1265, 0
    %1269 = vmatpush.bf16.msra.mxu0 0
    %1270 = vmatpush.bf16.msra.mxu0 0
    %1271 = vmatpush.bf16.msra.mxu0 0
    %1272 = vmatpush.bf16.msra.mxu0 0
    %1273 = vmatpush.bf16.msra.mxu0 0
    %1274 = vmatpush.bf16.msra.mxu0 0
    %1275 = vmatpush.bf16.msra.mxu0 %v544
    %1276 = vmatpush.bf16.msra.mxu0 %v543
    %1277 = vmatmul.bf16.gmra.mxu0 %v1267
    %v1278 = vpop.f32.mrf.mxu0
    %v1279 = vadd.f32 %v406, %v1278
    %v1280 = vpop.f32.mrf.mxu0
    %1281 = vdwg.mxu0
    %v1282 = vadd.f32 %v1279, %v1210
    %v1283 = vxor.u32 %v1282, 2147483648
    %v1284 = vmul.f32 %v1283, 1.442695
    %v1285 = vpow.pop %v1284
    %v1286 = vadd.f32 %v1285, 1.0
    %v1287 = vrcp.pop %v1286
    %v1288 = vmul.f32 %v1286, %v1287
    %v1289 = vsub.f32 1.0, %v1288
    %v1290 = vmul.f32 %v1287, %v1289
    %v1291 = vadd.f32 %v1287, %v1290
    %vm1292 = vweird.f32 %v1286
    %vm1293 = vweird.f32 %v1287
    %vm1294 = vmor %vm1292, %vm1293
    %v1295 = vsel %vm1294, %v1287, %v1291
    %v1296 = vand.u32 2147483647, %v1286
    %vm1297 = vcmp.eq.f32.partialorder %v1296, 8.507059e+37
    %v1298 = vand.u32 %v1286, 2147483648
    %v1299 = vor.u32 1.1754944e-38, %v1298
    %v1300 = vsel %vm1297, %v1299, %v1295
    %v1301 = vmul.f32 1.0, %v1300
    %v1302 = vadd.f32 %v1210, %v584
    %1304 = vrot.lane.b32.xlu0 %v1302, 64
    %v1305 = vpop.permute.xlu0 %1304
    %v1307 = vmul.f32 %v1301, %v1305
    %1309 = vrot.lane.b32.xlu0 %v1307, 64
    %v1310 = vpop.permute.xlu0 %1309
    %v1312 = vadd.f32 %v1279, %v1310
    %v1313 = vtanh.pop %v1312
    %v1314 = vsub.f32 1.0, %v1301
    %1316 = vrot.lane.b32.xlu0 %v1313, 96
    %v1317 = vpop.permute.xlu0 %1316
    %v1319 = vmul.f32 %v1314, %v1317
    %v1320 = vmul.f32 %v1301, %v1179
    %v1321 = vadd.f32 %v1319, %v1320
    %1322 = vmatpush.bf16.msra.mxu0 0
    %1323 = vmatpush.bf16.msra.mxu0 0
    %1324 = vmatpush.bf16.msra.mxu0 0
    %1325 = vmatpush.bf16.msra.mxu0 0
    %1326 = vmatpush.bf16.msra.mxu0 0
    %1327 = vmatpush.bf16.msra.mxu0 0
    %1328 = vmatpush.bf16.msra.mxu0 %v427
    %1329 = vmatpush.bf16.msra.mxu0 %v426
    %1330 = vmatmul.bf16.gmra.mxu0 %v1267
    %v1331 = vpop.f32.mrf.mxu0
    %v1332 = vadd.f32 0.0, %v1331
    %v1333 = vpop.f32.mrf.mxu0
    %1334 = vdwg.mxu0
    %v1335 = vpack.c.bf16 %v1321, %v1321
    %1337 = vrot.lane.b32.xlu0 %v1335, 96
    %v1338 = vpop.permute.xlu0 %1337
    %v1340 = vsel %vm211, %v1338, 0
    %1342 = vmatpush.bf16.msra.mxu0 0
    %1343 = vmatpush.bf16.msra.mxu0 0
    %1344 = vmatpush.bf16.msra.mxu0 0
    %1345 = vmatpush.bf16.msra.mxu0 0
    %1346 = vmatpush.bf16.msra.mxu0 0
    %1347 = vmatpush.bf16.msra.mxu0 0
    %1348 = vmatpush.bf16.msra.mxu0 %v460
    %1349 = vmatpush.bf16.msra.mxu0 %v459
    %1350 = vmatmul.bf16.gmra.mxu0 %v1340
    %v1351 = vpop.f32.mrf.mxu0
    %v1352 = vadd.f32 0.0, %v1351
    %v1353 = vpop.f32.mrf.mxu0
    %1354 = vdwg.mxu0
    %v1355 = vadd.f32 %v399, %v788
    %v1357 = vrot.slane %v1332, 4
    %v1359 = vadd.f32 %v1355, %v1357
    %v1360 = vxor.u32 %v1359, 2147483648
    %v1361 = vmul.f32 %v1360, 1.442695
    %v1362 = vpow.pop %v1361
    %v1363 = vadd.f32 %v1362, 1.0
    %v1364 = vrcp.pop %v1363
    %v1365 = vmul.f32 %v1363, %v1364
    %v1366 = vsub.f32 1.0, %v1365
    %v1367 = vmul.f32 %v1364, %v1366
    %v1368 = vadd.f32 %v1364, %v1367
    %vm1369 = vweird.f32 %v1363
    %vm1370 = vweird.f32 %v1364
    %vm1371 = vmor %vm1369, %vm1370
    %v1372 = vsel %vm1371, %v1364, %v1368
    %v1373 = vand.u32 2147483647, %v1363
    %vm1374 = vcmp.eq.f32.partialorder %v1373, 8.507059e+37
    %v1375 = vand.u32 %v1363, 2147483648
    %v1376 = vor.u32 1.1754944e-38, %v1375
    %v1377 = vsel %vm1374, %v1376, %v1372
    %v1378 = vmul.f32 1.0, %v1377
    %v1379 = vadd.f32 %v1332, %v501
    %v1381 = vrot.slane %v1379, 4
    %1382 = vrot.lane.b32.xlu0 %v1381, 64
    %v1383 = vpop.permute.xlu0 %1382
    %v1385 = vmul.f32 %v1378, %v1383
    %1387 = vrot.lane.b32.xlu0 %v1385, 64
    %v1388 = vpop.permute.xlu0 %1387
    %v1390 = vadd.f32 %v1355, %v1388
    %v1391 = vtanh.pop %v1390
    %v1392 = vsub.f32 1.0, %v1378
    %1394 = vrot.lane.b32.xlu0 %v1391, 96
    %v1395 = vpop.permute.xlu0 %1394
    %v1397 = vmul.f32 %v1392, %v1395
    %v1399 = vrot.slane %v1260, 6
    %v1401 = vmul.f32 %v1378, %v1399
    %v1402 = vadd.f32 %v1397, %v1401
    %v1403 = vpack.c.bf16 %v1402, %v1402
    %v1405 = vrot.slane %v1403, 2
    %1406 = vrot.lane.b32.xlu0 %v1405, 96
    %v1407 = vpop.permute.xlu0 %1406
    %v1409 = vsel %vm211, %v1407, 0
    %1411 = vmatpush.bf16.msra.mxu0 0
    %1412 = vmatpush.bf16.msra.mxu0 0
    %1413 = vmatpush.bf16.msra.mxu0 0
    %1414 = vmatpush.bf16.msra.mxu0 0
    %1415 = vmatpush.bf16.msra.mxu0 0
    %1416 = vmatpush.bf16.msra.mxu0 0
    %1417 = vmatpush.bf16.msra.mxu0 %v544
    %1418 = vmatpush.bf16.msra.mxu0 %v543
    %1419 = vmatmul.bf16.gmra.mxu0 %v1409
    %v1420 = vpop.f32.mrf.mxu0
    %v1421 = vadd.f32 %v406, %v1420
    %v1422 = vpop.f32.mrf.mxu0
    %1423 = vdwg.mxu0
    %v1424 = vadd.f32 %v1421, %v1352
    %v1425 = vxor.u32 %v1424, 2147483648
    %v1426 = vmul.f32 %v1425, 1.442695
    %v1427 = vpow.pop %v1426
    %v1428 = vadd.f32 %v1427, 1.0
    %v1429 = vrcp.pop %v1428
    %v1430 = vmul.f32 %v1428, %v1429
    %v1431 = vsub.f32 1.0, %v1430
    %v1432 = vmul.f32 %v1429, %v1431
    %v1433 = vadd.f32 %v1429, %v1432
    %vm1434 = vweird.f32 %v1428
    %vm1435 = vweird.f32 %v1429
    %vm1436 = vmor %vm1434, %vm1435
    %v1437 = vsel %vm1436, %v1429, %v1433
    %v1438 = vand.u32 2147483647, %v1428
    %vm1439 = vcmp.eq.f32.partialorder %v1438, 8.507059e+37
    %v1440 = vand.u32 %v1428, 2147483648
    %v1441 = vor.u32 1.1754944e-38, %v1440
    %v1442 = vsel %vm1439, %v1441, %v1437
    %v1443 = vmul.f32 1.0, %v1442
    %v1444 = vadd.f32 %v1352, %v584
    %1446 = vrot.lane.b32.xlu0 %v1444, 64
    %v1447 = vpop.permute.xlu0 %1446
    %v1449 = vmul.f32 %v1443, %v1447
    %1451 = vrot.lane.b32.xlu0 %v1449, 64
    %v1452 = vpop.permute.xlu0 %1451
    %v1454 = vadd.f32 %v1421, %v1452
    %v1455 = vtanh.pop %v1454
    %v1456 = vsub.f32 1.0, %v1443
    %1458 = vrot.lane.b32.xlu0 %v1455, 96
    %v1459 = vpop.permute.xlu0 %1458
    %v1461 = vmul.f32 %v1456, %v1459
    %v1462 = vmul.f32 %v1443, %v1321
    %v1463 = vadd.f32 %v1461, %v1462
    %1464 = vmatpush.bf16.msra.mxu0 0
    %1465 = vmatpush.bf16.msra.mxu0 0
    %1466 = vmatpush.bf16.msra.mxu0 0
    %1467 = vmatpush.bf16.msra.mxu0 0
    %1468 = vmatpush.bf16.msra.mxu0 0
    %1469 = vmatpush.bf16.msra.mxu0 0
    %1470 = vmatpush.bf16.msra.mxu0 %v427
    %1471 = vmatpush.bf16.msra.mxu0 %v426
    %1472 = vmatmul.bf16.gmra.mxu0 %v1409
    %v1473 = vpop.f32.mrf.mxu0
    %v1474 = vadd.f32 0.0, %v1473
    %v1475 = vpop.f32.mrf.mxu0
    %1476 = vdwg.mxu0
    %v1477 = vpack.c.bf16 %v1463, %v1463
    %1479 = vrot.lane.b32.xlu0 %v1477, 96
    %v1480 = vpop.permute.xlu0 %1479
    %v1482 = vsel %vm211, %v1480, 0
    %1484 = vmatpush.bf16.msra.mxu0 0
    %1485 = vmatpush.bf16.msra.mxu0 0
    %1486 = vmatpush.bf16.msra.mxu0 0
    %1487 = vmatpush.bf16.msra.mxu0 0
    %1488 = vmatpush.bf16.msra.mxu0 0
    %1489 = vmatpush.bf16.msra.mxu0 0
    %1490 = vmatpush.bf16.msra.mxu0 %v460
    %1491 = vmatpush.bf16.msra.mxu0 %v459
    %1492 = vmatmul.bf16.gmra.mxu0 %v1482
    %v1493 = vpop.f32.mrf.mxu0
    %v1494 = vadd.f32 0.0, %v1493
    %v1495 = vpop.f32.mrf.mxu0
    %1496 = vdwg.mxu0
    %v1497 = vadd.f32 %v399, %v932
    %v1499 = vrot.slane %v1474, 2
    %v1501 = vadd.f32 %v1497, %v1499
    %v1502 = vxor.u32 %v1501, 2147483648
    %v1503 = vmul.f32 %v1502, 1.442695
    %v1504 = vpow.pop %v1503
    %v1505 = vadd.f32 %v1504, 1.0
    %v1506 = vrcp.pop %v1505
    %v1507 = vmul.f32 %v1505, %v1506
    %v1508 = vsub.f32 1.0, %v1507
    %v1509 = vmul.f32 %v1506, %v1508
    %v1510 = vadd.f32 %v1506, %v1509
    %vm1511 = vweird.f32 %v1505
    %vm1512 = vweird.f32 %v1506
    %vm1513 = vmor %vm1511, %vm1512
    %v1514 = vsel %vm1513, %v1506, %v1510
    %v1515 = vand.u32 2147483647, %v1505
    %vm1516 = vcmp.eq.f32.partialorder %v1515, 8.507059e+37
    %v1517 = vand.u32 %v1505, 2147483648
    %v1518 = vor.u32 1.1754944e-38, %v1517
    %v1519 = vsel %vm1516, %v1518, %v1514
    %v1520 = vmul.f32 1.0, %v1519
    %v1521 = vadd.f32 %v1474, %v501
    %v1523 = vrot.slane %v1521, 2
    %1524 = vrot.lane.b32.xlu0 %v1523, 64
    %v1525 = vpop.permute.xlu0 %1524
    %v1527 = vmul.f32 %v1520, %v1525
    %1529 = vrot.lane.b32.xlu0 %v1527, 64
    %v1530 = vpop.permute.xlu0 %1529
    %v1532 = vadd.f32 %v1497, %v1530
    %v1533 = vtanh.pop %v1532
    %v1534 = vsub.f32 1.0, %v1520
    %1536 = vrot.lane.b32.xlu0 %v1533, 96
    %v1537 = vpop.permute.xlu0 %1536
    %v1539 = vmul.f32 %v1534, %v1537
    %v1541 = vrot.slane %v1402, 6
    %v1543 = vmul.f32 %v1520, %v1541
    %v1544 = vadd.f32 %v1539, %v1543
    %v1545 = vpack.c.bf16 %v1544, %v1544
    %v1547 = vrot.slane %v1545, 3
    %1548 = vrot.lane.b32.xlu0 %v1547, 96
    %v1549 = vpop.permute.xlu0 %1548
    %v1551 = vsel %vm211, %v1549, 0
    %1553 = vmatpush.bf16.msra.mxu0 0
    %1554 = vmatpush.bf16.msra.mxu0 0
    %1555 = vmatpush.bf16.msra.mxu0 0
    %1556 = vmatpush.bf16.msra.mxu0 0
    %1557 = vmatpush.bf16.msra.mxu0 0
    %1558 = vmatpush.bf16.msra.mxu0 0
    %1559 = vmatpush.bf16.msra.mxu0 %v544
    %1560 = vmatpush.bf16.msra.mxu0 %v543
    %1561 = vmatmul.bf16.gmra.mxu0 %v1551
    %v1562 = vpop.f32.mrf.mxu0
    %v1563 = vadd.f32 %v406, %v1562
    %v1564 = vpop.f32.mrf.mxu0
    %1565 = vdwg.mxu0
    %v1566 = vadd.f32 %v1563, %v1494
    %v1567 = vxor.u32 %v1566, 2147483648
    %v1568 = vmul.f32 %v1567, 1.442695
    %v1569 = vpow.pop %v1568
    %v1570 = vadd.f32 %v1569, 1.0
    %v1571 = vrcp.pop %v1570
    %v1572 = vmul.f32 %v1570, %v1571
    %v1573 = vsub.f32 1.0, %v1572
    %v1574 = vmul.f32 %v1571, %v1573
    %v1575 = vadd.f32 %v1571, %v1574
    %vm1576 = vweird.f32 %v1570
    %vm1577 = vweird.f32 %v1571
    %vm1578 = vmor %vm1576, %vm1577
    %v1579 = vsel %vm1578, %v1571, %v1575
    %v1580 = vand.u32 2147483647, %v1570
    %vm1581 = vcmp.eq.f32.partialorder %v1580, 8.507059e+37
    %v1582 = vand.u32 %v1570, 2147483648
    %v1583 = vor.u32 1.1754944e-38, %v1582
    %v1584 = vsel %vm1581, %v1583, %v1579
    %v1585 = vmul.f32 1.0, %v1584
    %v1586 = vadd.f32 %v1494, %v584
    %1588 = vrot.lane.b32.xlu0 %v1586, 64
    %v1589 = vpop.permute.xlu0 %1588
    %v1591 = vmul.f32 %v1585, %v1589
    %1593 = vrot.lane.b32.xlu0 %v1591, 64
    %v1594 = vpop.permute.xlu0 %1593
    %v1596 = vadd.f32 %v1563, %v1594
    %v1597 = vtanh.pop %v1596
    %v1598 = vsub.f32 1.0, %v1585
    %1600 = vrot.lane.b32.xlu0 %v1597, 96
    %v1601 = vpop.permute.xlu0 %1600
    %v1603 = vmul.f32 %v1598, %v1601
    %v1604 = vmul.f32 %v1585, %v1463
    %v1605 = vadd.f32 %v1603, %v1604
    %1607 = vrot.lane.b32.xlu0 %v1544, 96
    %v1608 = vpop.permute.xlu0 %1607
    %vm1610 = vcmask 261126
    %1611 = vst.msk [vmem:[#allocation18 - $0x6] sm:$0xc0] %vm1610, %v1608
    %1613 = vrot.lane.b32.xlu0 %v1605, 96
    %v1614 = vpop.permute.xlu0 %1613
    %s1616 = scalar_lea.vmem [#allocation18], 2
    %vm1617 = vcmask 254976
    %1618 = vst.msk [vmem:[%s1616] sm:$0x3] %vm1617, %v1614
    %v1620 = vrot.slane %v754, 6
    %v1623 = vrot.slane %v898, 4
    %v1626 = vrot.slane %v1042, 2
    %v1629 = vrot.slane %v1321, 6
    %v1632 = vrot.slane %v1463, 4
    %v1634 = vrot.slane %v1605, 2
    %vm1636 = vcmask 1041408
    %v1637 = vsel %vm1636, %v609, %v1620
    %v1638 = vsel %vm289, %v1637, %v1623
    %vm1639 = vcmask 1045504
    %v1640 = vsel %vm1639, %v1638, %v1626
    %v1641 = vsel %vm1636, %v1179, %v1629
    %v1642 = vsel %vm289, %v1641, %v1632
    %v1643 = vsel %vm1639, %v1642, %v1634
    %v1644 = vpack.c.bf16 %v1643, %v1640
    %v1645 = vld [vmem:[#allocation16] sm:$0xf]
    %v1646 = vld [vmem:[#allocation16 + $0x4] sm:$0xf]
    %v1647 = vld [vmem:[#allocation16 + $0x8] sm:$0xf]
    %v1648 = vld [vmem:[#allocation16 + $0xc] sm:$0xf]
    %v1649 = vld [vmem:[%s14] sm:$0x1]
    %v1651 = vperm.slane %v1649, 0
    %1654 = vrot.lane.b32.xlu0 %v1644, 96
    %v1655 = vpop.permute.xlu0 %1654
    %v1660 = vunpack.c.l.b16 %v1645
    %v1661 = vunpack.c.l.b16 %v1646
    %v1662 = vunpack.c.l.b16 %v1647
    %v1663 = vunpack.c.l.b16 %v1648
    %v1664 = vpack.c.b16 %v1661, %v1660
    %v1665 = vpack.c.b16 %v1663, %v1662
    %v1669 = vsel %vm211, %v1655, 0
    %1671 = vmatpush.bf16.msra.mxu0 0
    %1672 = vmatpush.bf16.msra.mxu0 0
    %1673 = vmatpush.bf16.msra.mxu0 0
    %1674 = vmatpush.bf16.msra.mxu0 0
    %1675 = vmatpush.bf16.msra.mxu0 0
    %1676 = vmatpush.bf16.msra.mxu0 0
    %1677 = vmatpush.bf16.msra.mxu0 %v1665
    %1678 = vmatpush.bf16.msra.mxu0 %v1664
    %1679 = vmatmul.bf16.gmra.mxu0 %v1669
    %v1680 = vpop.f32.mrf.mxu0
    %v1681 = vadd.f32 %v1651, %v1680
    %v1682 = vpop.f32.mrf.mxu0
    %v1683 = vadd.f32 %v1651, %v1682
    %1684 = vdwg.mxu0
    %1685 = vst [vmem:[#allocation17] sm:$0xff] %v1681
    %1686 = vst [vmem:[#allocation17 + $0x8] sm:$0xff] %v1683
    // Predicated region
    $region98: #{tpu_custom_call.1} parent=1 // pred_check
      _
    $region99: #{tpu_custom_call.1} parent=1 // pred_check_branch
      %1688 = sbr.rel (0) target = $region101
    $region100: #{tpu_custom_call.1} parent=1 // pred_region
      %1690 = vsyncadd [#allocation4], 0
      %s1691 = sshll.u32 [#allocation17], 4
      %s1692 = int_to_ptr.vmem [resolvable:$true] %s1691
      %s1693 = sshll.u32 %s15, 4
      %s1694 = int_to_ptr.hbm [resolvable:$true] %s1693
      %1699 = dma.vmem_to_hbm [thread:$0]  %s1692, 256, %s1694, [#allocation4], 128, 128, 8
    $region101: #{tpu_custom_call.1} parent=1 // pred_fallthru
      _
    // Predicated region
    $region102: #{tpu_custom_call.1} parent=1 // pred_check
      _
    $region103: #{tpu_custom_call.1} parent=1 // pred_check_branch
      %1701 = sbr.rel (0) target = $region105
    $region104: #{tpu_custom_call.1} parent=1 // pred_region
      %1703 = vsyncadd [#allocation19], 0
      %s1704 = sshll.u32 [#allocation18], 4
      %s1705 = int_to_ptr.vmem [resolvable:$true] %s1704
      %s1706 = sshll.u32 %s16, 4
      %s1707 = int_to_ptr.hbm [resolvable:$true] %s1706
      %1712 = dma.vmem_to_hbm [thread:$0]  %s1705, 64, %s1707, [#allocation19], 32, 32, 2
    $region105: #{tpu_custom_call.1} parent=1 // pred_fallthru
      _
    // Predicated region
    $region106: #{tpu_custom_call.1} parent=1 // pred_check
      _
    $region107: #{tpu_custom_call.1} parent=1 // pred_check_branch
      %1714 = sbr.rel (0) target = $region109
    $region108: #{tpu_custom_call.1} parent=1 // pred_region
      %1716 = dma.done [#allocation4], 256
    $region109: #{tpu_custom_call.1} parent=1 // pred_fallthru
      _
    // Predicated region
    $region110: #{tpu_custom_call.1} parent=1 // pred_check
      _
    $region111: #{tpu_custom_call.1} parent=1 // pred_check_branch
      %1718 = sbr.rel (0) target = $region113
    $region112: #{tpu_custom_call.1} parent=1 // pred_region
      %1720 = dma.done [#allocation19], 64
    $region113: #{tpu_custom_call.1} parent=1 // pred_fallthru
      _
    %1721 = vsyncpa [#allocation3], 1
    %1722 = vsyncpa [#allocation6], 1
    %1723 = vsyncpa [#allocation9], 1
    %1724 = vsyncpa [#allocation12], 1
    %1725 = vsyncpa [#allocation15], 1
    %1726 = vsyncpa [#allocation4], 1
    %1727 = vsyncpa [#allocation19], 1

</llo_original>
